<compile_context>
chip_gen: v5e
topology: v5e:2x2
jax: 0.10.0
libtpu: 0.0.40
codegen_flags: <defaults>
</compile_context>

<pallas_src>
import functools

import jax
import jax.numpy as jnp
from jax import lax
from jax.experimental import pallas as pl
from jax.experimental.pallas import tpu as pltpu


def _classifier_kernel(
    ids_f_ref,    # (T*B, 1)  i32  token ids, time-major:   row t*B+b = text[b, t]
    ids_b_ref,    # (T*B, 1)  i32  token ids, reversed:     row s*B+b = text[b, T-1-s]
    len_ref,      # (B, 1)    i32  sequence lengths
    emb_ref,      # (V, E)    bf16 embedding table (VMEM-resident)
    wihf_ref,     # (E, 8H)   bf16 fwd input weights in fused cols (bwd cols zero)
    wihb_ref,     # (E, 8H)   bf16 bwd input weights in fused cols (fwd cols zero)
    bih_ref,      # (1, 8H)   f32  fused combined biases (b_ih + b_hh per direction)
    whh_ref,      # (2H, 8H)  bf16 block-diagonal recurrent weights
    wh_ref,       # (2H, D)   bf16 fused head weights [action|size|color|item]
    bh_ref,       # (1, D)    f32  fused head biases
    out_ref,      # (B, D)    f32  concatenated per-head softmax probabilities
    xp_ref,       # (T, B, 8H) f32 scratch: per-step fused input projections
    *, T, B, H, V, head_dims,
):
    f32 = jnp.float32
    bf16 = jnp.bfloat16
    H2 = 2 * H
    H8 = 8 * H
    D = sum(head_dims)

    # ---- (1) In-kernel embedding gather via one-hot bf16 matmuls -------------
    lane_v = lax.broadcasted_iota(jnp.int32, (T * B, V), 1)
    oh_f = jnp.where(lane_v == ids_f_ref[...], 1.0, 0.0).astype(bf16)   # (T*B, V)
    oh_b = jnp.where(lane_v == ids_b_ref[...], 1.0, 0.0).astype(bf16)
    x_f = jnp.dot(oh_f, emb_ref[...], preferred_element_type=f32).astype(bf16)
    x_b = jnp.dot(oh_b, emb_ref[...], preferred_element_type=f32).astype(bf16)

    # ---- (2) Hoisted input projections for BOTH directions, fused layout -----
    # Column halves: fwd gate columns come from x_f (time s), bwd gate columns
    # from x_b (time T-1-s) — already in per-step order, so the recurrence reads
    # one aligned (B, 8H) tile per step from the 3D scratch.
    xp = (jnp.dot(x_f, wihf_ref[...], preferred_element_type=f32)
          + jnp.dot(x_b, wihb_ref[...], preferred_element_type=f32)
          + bih_ref[...])                                              # (T*B, 8H)
    for s in range(T):
        xp_ref[s] = xp[s * B:(s + 1) * B, :]

    # ---- (3) Masks hoisted out of the recurrence -----------------------------
    lengths = len_ref[...]                                             # (B, 1)
    col2 = lax.broadcasted_iota(jnp.int32, (B, H2), 1)
    is_fwd = col2 < H
    is_bwd = jnp.logical_not(is_fwd)
    valid_steps = [
        (is_fwd & (lengths > s)) | (is_bwd & (lengths > (T - 1 - s)))
        for s in range(T)
    ]
    lane8 = lax.broadcasted_iota(jnp.int32, (B, H8), 1)
    g_sel = (lane8 >= 4 * H) & (lane8 < 6 * H)   # g-gate block in fused layout

    whh = whh_ref[...]                           # loop-invariant (2H, 8H) bf16

    h2 = jnp.zeros((B, H2), f32)                 # [h_fwd | h_bwd]
    c2 = jnp.zeros((B, H2), f32)

    # ---- (4) Fused bidirectional recurrence (fully unrolled, T small/static) -
    for s in range(T):
        gates = xp_ref[s] + jnp.dot(h2.astype(bf16), whh,
                                    preferred_element_type=f32)        # (B, 8H)
        sg = jax.nn.sigmoid(gates)
        tg = jnp.tanh(gates)
        acts = jnp.where(g_sel, tg, sg)
        i_g = acts[:, 0 * H2:1 * H2]
        f_g = acts[:, 1 * H2:2 * H2]
        g_g = acts[:, 2 * H2:3 * H2]
        o_g = acts[:, 3 * H2:4 * H2]
        c_new = f_g * c2 + i_g * g_g
        h_new = o_g * jnp.tanh(c_new)
        v = valid_steps[s]                        # packed-sequence freeze (vselect)
        h2 = jnp.where(v, h_new, h2)
        c2 = jnp.where(v, c_new, c2)

    # ---- (5) Fused heads + 4-segment softmax ---------------------------------
    logits = (jnp.dot(h2.astype(bf16), wh_ref[...], preferred_element_type=f32)
              + bh_ref[...])                                           # (B, D)
    # Block-diagonal segment-indicator matrix built from static head_dims.
    bounds = []
    off = 0
    for w in head_dims[:-1]:
        off += w
        bounds.append(off)
    r_id = lax.broadcasted_iota(jnp.int32, (D, D), 0)
    c_id = lax.broadcasted_iota(jnp.int32, (D, D), 1)
    seg_r = jnp.zeros((D, D), jnp.int32)
    seg_c = jnp.zeros((D, D), jnp.int32)
    for bd in bounds:
        seg_r = seg_r + (r_id >= bd).astype(jnp.int32)
        seg_c = seg_c + (c_id >= bd).astype(jnp.int32)
    seg_mat = (seg_r == seg_c).astype(f32)                             # (D, D)

    m = jnp.max(logits, axis=1, keepdims=True)    # one row max (valid per-segment)
    e = jnp.exp(logits - m)                       # one exp over full (B, D)
    denom = jnp.dot(e, seg_mat, preferred_element_type=f32)   # per-lane segment sums
    out_ref[...] = e * pl.reciprocal(denom)       # exact reciprocal (approx=False)


# ----------------------------------------------------------------------------
# Parameters (standard layout) + fused/bf16 kernel layout
# ----------------------------------------------------------------------------
def init_params(key, vocab_size, embedding_dim, hidden_dim, output_dims):
    """Deterministic synthetic parameters (PyTorch-style uniform init) in the
    standard [i f g o] gate layout."""
    ks = jax.random.split(key, 20)
    H, E = hidden_dim, embedding_dim
    s = 1.0 / jnp.sqrt(jnp.float32(H))

    def u(k, shape, scale):
        return jax.random.uniform(k, shape, jnp.float32, -scale, scale)

    p = {}
    p["embedding"] = jax.random.normal(ks[0], (vocab_size, E), jnp.float32)
    p["wih_f"] = u(ks[1], (E, 4 * H), s)
    p["wih_b"] = u(ks[2], (E, 4 * H), s)
    p["b_f"] = u(ks[3], (1, 4 * H), s) + u(ks[4], (1, 4 * H), s)   # b_ih + b_hh
    p["b_b"] = u(ks[5], (1, 4 * H), s) + u(ks[6], (1, 4 * H), s)
    p["whh_f"] = u(ks[7], (H, 4 * H), s)
    p["whh_b"] = u(ks[8], (H, 4 * H), s)

    d_in = 2 * H
    sl = 1.0 / jnp.sqrt(jnp.float32(d_in))
    wa, ba = u(ks[9], (d_in, output_dims["action"]), sl), u(ks[10], (1, output_dims["action"]), sl)
    wsz, bsz = u(ks[11], (d_in, output_dims["size"]), sl), u(ks[12], (1, output_dims["size"]), sl)
    wc, bc = u(ks[13], (d_in, output_dims["color"]), sl), u(ks[14], (1, output_dims["color"]), sl)
    wi, bi = u(ks[15], (d_in, output_dims["item"]), sl), u(ks[16], (1, output_dims["item"]), sl)
    # PyTorch return order: action, size, color, item.
    p["w_heads"] = jnp.concatenate([wa, wsz, wc, wi], axis=1)       # (2H, D)
    p["b_heads"] = jnp.concatenate([ba, bsz, bc, bi], axis=1)       # (1, D)
    return p


def _interleave_gate_blocks(w_f, w_b, H):
    """(rows,4H)+(rows,4H) -> (rows,8H) in gate-major / direction-minor order
    [i_f i_b | f_f f_b | g_f g_b | o_f o_b]."""
    parts = []
    for g in range(4):
        parts.append(w_f[:, g * H:(g + 1) * H])
        parts.append(w_b[:, g * H:(g + 1) * H])
    return jnp.concatenate(parts, axis=1)


def fuse_params(p, hidden_dim):
    """One-time weight re-layout + bf16 cast for the kernel."""
    H = hidden_dim
    E = p["wih_f"].shape[0]
    zE = jnp.zeros((E, 4 * H), jnp.float32)
    zH = jnp.zeros((H, 4 * H), jnp.float32)
    fp = {}
    fp["emb"] = p["embedding"].astype(jnp.bfloat16)
    fp["wih_f_fused"] = _interleave_gate_blocks(p["wih_f"], zE, H).astype(jnp.bfloat16)
    fp["wih_b_fused"] = _interleave_gate_blocks(zE, p["wih_b"], H).astype(jnp.bfloat16)
    fp["bih_fused"] = _interleave_gate_blocks(p["b_f"], p["b_b"], H)           # f32
    whh_top = _interleave_gate_blocks(p["whh_f"], zH, H)                        # rows = h_f
    whh_bot = _interleave_gate_blocks(zH, p["whh_b"], H)                        # rows = h_b
    fp["whh_fused"] = jnp.concatenate([whh_top, whh_bot], axis=0).astype(jnp.bfloat16)
    fp["w_heads"] = p["w_heads"].astype(jnp.bfloat16)
    fp["b_heads"] = p["b_heads"]                                                # f32
    return fp


@functools.partial(jax.jit, static_argnames=("head_dims",))
def classifier_forward(text, text_lengths, fparams, *, head_dims):
    """head_dims: hashable tuple (action, size, color, item) output widths."""
    B, T = text.shape
    V, E = fparams["emb"].shape
    H = fparams["whh_fused"].shape[0] // 2
    D = sum(head_dims)

    # Only tiny int32 glue remains in the wrapper (ids in fwd/reversed time-major
    # order + lengths); the float embedding gather happens inside the kernel.
    ids_f = text.T.reshape(T * B, 1).astype(jnp.int32)
    ids_b = text[:, ::-1].T.reshape(T * B, 1).astype(jnp.int32)
    lengths = text_lengths.astype(jnp.int32).reshape(B, 1)

    vmem = pl.BlockSpec(memory_space=pltpu.MemorySpace.VMEM)
    kernel = functools.partial(_classifier_kernel, T=T, B=B, H=H, V=V,
                               head_dims=head_dims)

    fused = pl.pallas_call(
        kernel,
        out_shape=jax.ShapeDtypeStruct((B, D), jnp.float32),
        in_specs=[vmem] * 10,
        out_specs=vmem,
        scratch_shapes=[pltpu.VMEM((T, B, 8 * H), jnp.float32)],
    )(
        ids_f, ids_b, lengths,
        fparams["emb"],
        fparams["wih_f_fused"], fparams["wih_b_fused"], fparams["bih_fused"],
        fparams["whh_fused"],
        fparams["w_heads"], fparams["b_heads"],
    )

    # Split the lane-concatenated output back into the four heads
    # (PyTorch return order: [action, size, color, item]).
    outs = []
    off = 0
    for w in head_dims:
        outs.append(fused[:, off:off + w])
        off += w
    return outs


# ----------------------------------------------------------------------------
# Pure-JAX reference (standard layout). matmul_dtype=bf16 matches the kernel's
# MXU operand precision; matmul_dtype=f32 is the full-precision reference.
# ----------------------------------------------------------------------------
def _reference_forward(text, text_lengths, params, head_dims,
                       matmul_dtype=jnp.bfloat16):
    B, T = text.shape
    H = params["whh_f"].shape[0]

    def mm(a, b):
        return jnp.dot(a.astype(matmul_dtype), b.astype(matmul_dtype),
                       preferred_element_type=jnp.float32,
                       precision=jax.lax.Precision.HIGHEST)

    x = jnp.take(params["embedding"], text, axis=0).astype(jnp.float32)
    lengths = text_lengths.astype(jnp.int32)

    def run(wih, bih, whh, reverse):
        h = jnp.zeros((B, H), jnp.float32)
        c = jnp.zeros((B, H), jnp.float32)
        order = range(T - 1, -1, -1) if reverse else range(T)
        for t in order:
            gates = mm(x[:, t, :], wih) + bih + mm(h, whh)
            i = jax.nn.sigmoid(gates[:, 0:H])
            f = jax.nn.sigmoid(gates[:, H:2 * H])
            g = jnp.tanh(gates[:, 2 * H:3 * H])
            o = jax.nn.sigmoid(gates[:, 3 * H:4 * H])
            c_new = f * c + i * g
            h_new = o * jnp.tanh(c_new)
            msk = (lengths > t)[:, None]
            h = jnp.where(msk, h_new, h)
            c = jnp.where(msk, c_new, c)
        return h

    h_f = run(params["wih_f"], params["b_f"], params["whh_f"], False)
    h_b = run(params["wih_b"], params["b_b"], params["whh_b"], True)
    hidden = jnp.concatenate([h_f, h_b], axis=1)
    logits = mm(hidden, params["w_heads"]) + params["b_heads"]
    outs = []
    off = 0
    for w in head_dims:
        outs.append(jax.nn.softmax(logits[:, off:off + w], axis=1))
        off += w
    return outs


if __name__ == "__main__":
    vocab_size = 50
    embedding_dim = 30
    hidden_dim = 32
    output_dims = {"action": 8, "item": 12, "color": 6, "size": 4}
    # Static, hashable head order matching the PyTorch return order.
    head_dims = (output_dims["action"], output_dims["size"],
                 output_dims["color"], output_dims["item"])

    B, T = 2, 8
    key = jax.random.PRNGKey(0)
    k_tok, k_par = jax.random.split(key)

    text = jax.random.randint(k_tok, (B, T), 0, vocab_size, dtype=jnp.int32)
    # pack_padded_sequence expects lengths sorted in descending order.
    text_lengths = jnp.array([8, 5], dtype=jnp.int32)

    params = init_params(k_par, vocab_size, embedding_dim, hidden_dim,
                         output_dims)
    fparams = fuse_params(params, hidden_dim)

    outs = classifier_forward(text, text_lengths, fparams, head_dims=head_dims)
    outs = jax.block_until_ready(outs)

    # Matched-precision reference (bf16 MXU operands, f32 math) and full-f32
    # reference.
    refs_m = _reference_forward(text, text_lengths, params, head_dims,
                                matmul_dtype=jnp.bfloat16)
    refs_f = _reference_forward(text, text_lengths, params, head_dims,
                                matmul_dtype=jnp.float32)

    for o, rm, rf, w in zip(outs, refs_m, refs_f, head_dims):
        assert o.shape == (B, w)
        # Exact reciprocal in the kernel -> rows sum to ~1.
        assert bool(jnp.all(jnp.abs(jnp.sum(o, axis=1) - 1.0) < 1e-3))
        # Tight check against the matched-precision reference.
        assert bool(jnp.all(jnp.abs(o - rm) < 3e-3))
        # Loose check of bf16-matmul drift against full-f32 math.
        assert bool(jnp.all(jnp.abs(o - rf) < 5e-2))

    print("KERNEL_OK")
</pallas_src>

<mosaic_0001>
module attributes {stable_mosaic.version = 11 : i64} {
  func.func @_classifier_kernel(%arg0: memref<16x1xi32, #tpu.memory_space<vmem>>, %arg1: memref<16x1xi32, #tpu.memory_space<vmem>>, %arg2: memref<2x1xi32, #tpu.memory_space<vmem>>, %arg3: memref<50x30xbf16, #tpu.memory_space<vmem>>, %arg4: memref<30x256xbf16, #tpu.memory_space<vmem>>, %arg5: memref<30x256xbf16, #tpu.memory_space<vmem>>, %arg6: memref<1x256xf32, #tpu.memory_space<vmem>>, %arg7: memref<64x256xbf16, #tpu.memory_space<vmem>>, %arg8: memref<64x30xbf16, #tpu.memory_space<vmem>>, %arg9: memref<1x30xf32, #tpu.memory_space<vmem>>, %arg10: memref<2x30xf32, #tpu.memory_space<vmem>>, %arg11: memref<8x2x256xf32, #tpu.memory_space<vmem>>) attributes {dimension_semantics = [], scalar_prefetch = 0 : i64, scratch_operands = 1 : i64, tpu.core_type = #tpu.core_type<tc>} {
    %0 = tpu.iota {dimensions = array<i32: 1>} : vector<16x50xi32>
    %c0 = arith.constant 0 : index
    %c0_0 = arith.constant 0 : index
    %1 = vector.load %arg0[%c0, %c0_0] : memref<16x1xi32, #tpu.memory_space<vmem>>, vector<16x1xi32>
    %2 = vector.broadcast %1 : vector<16x1xi32> to vector<16x50xi32>
    %3 = arith.cmpi eq, %0, %2 : vector<16x50xi32>
    %cst = arith.constant 1.000000e+00 : f32
    %cst_1 = arith.constant 0.000000e+00 : f32
    %4 = vector.broadcast %cst : f32 to vector<16x50xf32>
    %5 = vector.broadcast %cst_1 : f32 to vector<16x50xf32>
    %6 = arith.select %3, %4, %5 : vector<16x50xi1>, vector<16x50xf32>
    %7 = arith.truncf %6 : vector<16x50xf32> to vector<16x50xbf16>
    %c0_2 = arith.constant 0 : index
    %c0_3 = arith.constant 0 : index
    %8 = vector.load %arg1[%c0_2, %c0_3] : memref<16x1xi32, #tpu.memory_space<vmem>>, vector<16x1xi32>
    %9 = vector.broadcast %8 : vector<16x1xi32> to vector<16x50xi32>
    %10 = arith.cmpi eq, %0, %9 : vector<16x50xi32>
    %cst_4 = arith.constant 1.000000e+00 : f32
    %cst_5 = arith.constant 0.000000e+00 : f32
    %11 = vector.broadcast %cst_4 : f32 to vector<16x50xf32>
    %12 = vector.broadcast %cst_5 : f32 to vector<16x50xf32>
    %13 = arith.select %10, %11, %12 : vector<16x50xi1>, vector<16x50xf32>
    %14 = arith.truncf %13 : vector<16x50xf32> to vector<16x50xbf16>
    %c0_6 = arith.constant 0 : index
    %c0_7 = arith.constant 0 : index
    %15 = vector.load %arg3[%c0_6, %c0_7] : memref<50x30xbf16, #tpu.memory_space<vmem>>, vector<50x30xbf16>
    %cst_8 = arith.constant dense<0.000000e+00> : vector<16x30xf32>
    %16 = tpu.matmul %7, %15, %cst_8 {dimension_numbers = #tpu.dot_dimension_numbers<[1], [0], [0], [1], [0, 0, 1, 1], [], []>} : vector<16x50xbf16>, vector<50x30xbf16>, vector<16x30xf32> -> vector<16x30xf32>
    %17 = arith.truncf %16 : vector<16x30xf32> to vector<16x30xbf16>
    %c0_9 = arith.constant 0 : index
    %c0_10 = arith.constant 0 : index
    %18 = vector.load %arg3[%c0_9, %c0_10] : memref<50x30xbf16, #tpu.memory_space<vmem>>, vector<50x30xbf16>
    %cst_11 = arith.constant dense<0.000000e+00> : vector<16x30xf32>
    %19 = tpu.matmul %14, %18, %cst_11 {dimension_numbers = #tpu.dot_dimension_numbers<[1], [0], [0], [1], [0, 0, 1, 1], [], []>} : vector<16x50xbf16>, vector<50x30xbf16>, vector<16x30xf32> -> vector<16x30xf32>
    %20 = arith.truncf %19 : vector<16x30xf32> to vector<16x30xbf16>
    %c0_12 = arith.constant 0 : index
    %c0_13 = arith.constant 0 : index
    %21 = vector.load %arg4[%c0_12, %c0_13] : memref<30x256xbf16, #tpu.memory_space<vmem>>, vector<30x256xbf16>
    %cst_14 = arith.constant dense<0.000000e+00> : vector<16x256xf32>
    %22 = tpu.matmul %17, %21, %cst_14 {dimension_numbers = #tpu.dot_dimension_numbers<[1], [0], [0], [1], [0, 0, 1, 1], [], []>} : vector<16x30xbf16>, vector<30x256xbf16>, vector<16x256xf32> -> vector<16x256xf32>
    %c0_15 = arith.constant 0 : index
    %c0_16 = arith.constant 0 : index
    %23 = vector.load %arg5[%c0_15, %c0_16] : memref<30x256xbf16, #tpu.memory_space<vmem>>, vector<30x256xbf16>
    %cst_17 = arith.constant dense<0.000000e+00> : vector<16x256xf32>
    %24 = tpu.matmul %20, %23, %cst_17 {dimension_numbers = #tpu.dot_dimension_numbers<[1], [0], [0], [1], [0, 0, 1, 1], [], []>} : vector<16x30xbf16>, vector<30x256xbf16>, vector<16x256xf32> -> vector<16x256xf32>
    %25 = arith.addf %22, %24 : vector<16x256xf32>
    %c0_18 = arith.constant 0 : index
    %c0_19 = arith.constant 0 : index
    %26 = vector.load %arg6[%c0_18, %c0_19] : memref<1x256xf32, #tpu.memory_space<vmem>>, vector<1x256xf32>
    %27 = vector.broadcast %26 : vector<1x256xf32> to vector<16x256xf32>
    %28 = arith.addf %25, %27 : vector<16x256xf32>
    %29 = vector.extract_strided_slice %28 {offsets = [0, 0], sizes = [2, 256], strides = [1, 1]} : vector<16x256xf32> to vector<2x256xf32>
    %c0_20 = arith.constant 0 : index
    %c0_21 = arith.constant 0 : index
    %c0_22 = arith.constant 0 : index
    %30 = vector.load %arg11[%c0_20, %c0_21, %c0_22] : memref<8x2x256xf32, #tpu.memory_space<vmem>>, vector<1x2x256xf32>
    %31 = vector.shape_cast %30 : vector<1x2x256xf32> to vector<2x256xf32>
    %32 = vector.shape_cast %29 : vector<2x256xf32> to vector<1x2x256xf32>
    tpu.vector_store %arg11[%c0_20, %c0_21, %c0_22], %32 {strides = array<i32>} : memref<8x2x256xf32, #tpu.memory_space<vmem>>, vector<1x2x256xf32>,
    %33 = vector.extract_strided_slice %28 {offsets = [2, 0], sizes = [2, 256], strides = [1, 1]} : vector<16x256xf32> to vector<2x256xf32>
    %c1 = arith.constant 1 : index
    %c0_23 = arith.constant 0 : index
    %c0_24 = arith.constant 0 : index
    %34 = vector.load %arg11[%c1, %c0_23, %c0_24] : memref<8x2x256xf32, #tpu.memory_space<vmem>>, vector<1x2x256xf32>
    %35 = vector.shape_cast %34 : vector<1x2x256xf32> to vector<2x256xf32>
    %36 = vector.shape_cast %33 : vector<2x256xf32> to vector<1x2x256xf32>
    tpu.vector_store %arg11[%c1, %c0_23, %c0_24], %36 {strides = array<i32>} : memref<8x2x256xf32, #tpu.memory_space<vmem>>, vector<1x2x256xf32>,
    %37 = vector.extract_strided_slice %28 {offsets = [4, 0], sizes = [2, 256], strides = [1, 1]} : vector<16x256xf32> to vector<2x256xf32>
    %c2 = arith.constant 2 : index
    %c0_25 = arith.constant 0 : index
    %c0_26 = arith.constant 0 : index
    %38 = vector.load %arg11[%c2, %c0_25, %c0_26] : memref<8x2x256xf32, #tpu.memory_space<vmem>>, vector<1x2x256xf32>
    %39 = vector.shape_cast %38 : vector<1x2x256xf32> to vector<2x256xf32>
    %40 = vector.shape_cast %37 : vector<2x256xf32> to vector<1x2x256xf32>
    tpu.vector_store %arg11[%c2, %c0_25, %c0_26], %40 {strides = array<i32>} : memref<8x2x256xf32, #tpu.memory_space<vmem>>, vector<1x2x256xf32>,
    %41 = vector.extract_strided_slice %28 {offsets = [6, 0], sizes = [2, 256], strides = [1, 1]} : vector<16x256xf32> to vector<2x256xf32>
    %c3 = arith.constant 3 : index
    %c0_27 = arith.constant 0 : index
    %c0_28 = arith.constant 0 : index
    %42 = vector.load %arg11[%c3, %c0_27, %c0_28] : memref<8x2x256xf32, #tpu.memory_space<vmem>>, vector<1x2x256xf32>
    %43 = vector.shape_cast %42 : vector<1x2x256xf32> to vector<2x256xf32>
    %44 = vector.shape_cast %41 : vector<2x256xf32> to vector<1x2x256xf32>
    tpu.vector_store %arg11[%c3, %c0_27, %c0_28], %44 {strides = array<i32>} : memref<8x2x256xf32, #tpu.memory_space<vmem>>, vector<1x2x256xf32>,
    %45 = vector.extract_strided_slice %28 {offsets = [8, 0], sizes = [2, 256], strides = [1, 1]} : vector<16x256xf32> to vector<2x256xf32>
    %c4 = arith.constant 4 : index
    %c0_29 = arith.constant 0 : index
    %c0_30 = arith.constant 0 : index
    %46 = vector.load %arg11[%c4, %c0_29, %c0_30] : memref<8x2x256xf32, #tpu.memory_space<vmem>>, vector<1x2x256xf32>
    %47 = vector.shape_cast %46 : vector<1x2x256xf32> to vector<2x256xf32>
    %48 = vector.shape_cast %45 : vector<2x256xf32> to vector<1x2x256xf32>
    tpu.vector_store %arg11[%c4, %c0_29, %c0_30], %48 {strides = array<i32>} : memref<8x2x256xf32, #tpu.memory_space<vmem>>, vector<1x2x256xf32>,
    %49 = vector.extract_strided_slice %28 {offsets = [10, 0], sizes = [2, 256], strides = [1, 1]} : vector<16x256xf32> to vector<2x256xf32>
    %c5 = arith.constant 5 : index
    %c0_31 = arith.constant 0 : index
    %c0_32 = arith.constant 0 : index
    %50 = vector.load %arg11[%c5, %c0_31, %c0_32] : memref<8x2x256xf32, #tpu.memory_space<vmem>>, vector<1x2x256xf32>
    %51 = vector.shape_cast %50 : vector<1x2x256xf32> to vector<2x256xf32>
    %52 = vector.shape_cast %49 : vector<2x256xf32> to vector<1x2x256xf32>
    tpu.vector_store %arg11[%c5, %c0_31, %c0_32], %52 {strides = array<i32>} : memref<8x2x256xf32, #tpu.memory_space<vmem>>, vector<1x2x256xf32>,
    %53 = vector.extract_strided_slice %28 {offsets = [12, 0], sizes = [2, 256], strides = [1, 1]} : vector<16x256xf32> to vector<2x256xf32>
    %c6 = arith.constant 6 : index
    %c0_33 = arith.constant 0 : index
    %c0_34 = arith.constant 0 : index
    %54 = vector.load %arg11[%c6, %c0_33, %c0_34] : memref<8x2x256xf32, #tpu.memory_space<vmem>>, vector<1x2x256xf32>
    %55 = vector.shape_cast %54 : vector<1x2x256xf32> to vector<2x256xf32>
    %56 = vector.shape_cast %53 : vector<2x256xf32> to vector<1x2x256xf32>
    tpu.vector_store %arg11[%c6, %c0_33, %c0_34], %56 {strides = array<i32>} : memref<8x2x256xf32, #tpu.memory_space<vmem>>, vector<1x2x256xf32>,
    %57 = vector.extract_strided_slice %28 {offsets = [14, 0], sizes = [2, 256], strides = [1, 1]} : vector<16x256xf32> to vector<2x256xf32>
    %c7 = arith.constant 7 : index
    %c0_35 = arith.constant 0 : index
    %c0_36 = arith.constant 0 : index
    %58 = vector.load %arg11[%c7, %c0_35, %c0_36] : memref<8x2x256xf32, #tpu.memory_space<vmem>>, vector<1x2x256xf32>
    %59 = vector.shape_cast %58 : vector<1x2x256xf32> to vector<2x256xf32>
    %60 = vector.shape_cast %57 : vector<2x256xf32> to vector<1x2x256xf32>
    tpu.vector_store %arg11[%c7, %c0_35, %c0_36], %60 {strides = array<i32>} : memref<8x2x256xf32, #tpu.memory_space<vmem>>, vector<1x2x256xf32>,
    %c0_37 = arith.constant 0 : index
    %c0_38 = arith.constant 0 : index
    %61 = vector.load %arg2[%c0_37, %c0_38] : memref<2x1xi32, #tpu.memory_space<vmem>>, vector<2x1xi32>
    %62 = tpu.iota {dimensions = array<i32: 1>} : vector<2x64xi32>
    %c32_i32 = arith.constant 32 : i32
    %63 = vector.broadcast %c32_i32 : i32 to vector<2x64xi32>
    %64 = arith.cmpi slt, %62, %63 : vector<2x64xi32>
    %cst_39 = arith.constant dense<true> : vector<2x64xi1>
    %65 = arith.xori %64, %cst_39 : vector<2x64xi1>
    %c0_i32 = arith.constant 0 : i32
    %66 = vector.broadcast %c0_i32 : i32 to vector<2x1xi32>
    %67 = arith.cmpi sgt, %61, %66 : vector<2x1xi32>
    %68 = vector.broadcast %67 : vector<2x1xi1> to vector<2x64xi1>
    %69 = arith.andi %64, %68 : vector<2x64xi1>
    %c7_i32 = arith.constant 7 : i32
    %70 = vector.broadcast %c7_i32 : i32 to vector<2x1xi32>
    %71 = arith.cmpi sgt, %61, %70 : vector<2x1xi32>
    %72 = vector.broadcast %71 : vector<2x1xi1> to vector<2x64xi1>
    %73 = arith.andi %65, %72 : vector<2x64xi1>
    %74 = arith.ori %69, %73 : vector<2x64xi1>
    %c1_i32 = arith.constant 1 : i32
    %75 = vector.broadcast %c1_i32 : i32 to vector<2x1xi32>
    %76 = arith.cmpi sgt, %61, %75 : vector<2x1xi32>
    %77 = vector.broadcast %76 : vector<2x1xi1> to vector<2x64xi1>
    %78 = arith.andi %64, %77 : vector<2x64xi1>
    %c6_i32 = arith.constant 6 : i32
    %79 = vector.broadcast %c6_i32 : i32 to vector<2x1xi32>
    %80 = arith.cmpi sgt, %61, %79 : vector<2x1xi32>
    %81 = vector.broadcast %80 : vector<2x1xi1> to vector<2x64xi1>
    %82 = arith.andi %65, %81 : vector<2x64xi1>
    %83 = arith.ori %78, %82 : vector<2x64xi1>
    %c2_i32 = arith.constant 2 : i32
    %84 = vector.broadcast %c2_i32 : i32 to vector<2x1xi32>
    %85 = arith.cmpi sgt, %61, %84 : vector<2x1xi32>
    %86 = vector.broadcast %85 : vector<2x1xi1> to vector<2x64xi1>
    %87 = arith.andi %64, %86 : vector<2x64xi1>
    %c5_i32 = arith.constant 5 : i32
    %88 = vector.broadcast %c5_i32 : i32 to vector<2x1xi32>
    %89 = arith.cmpi sgt, %61, %88 : vector<2x1xi32>
    %90 = vector.broadcast %89 : vector<2x1xi1> to vector<2x64xi1>
    %91 = arith.andi %65, %90 : vector<2x64xi1>
    %92 = arith.ori %87, %91 : vector<2x64xi1>
    %c3_i32 = arith.constant 3 : i32
    %93 = vector.broadcast %c3_i32 : i32 to vector<2x1xi32>
    %94 = arith.cmpi sgt, %61, %93 : vector<2x1xi32>
    %95 = vector.broadcast %94 : vector<2x1xi1> to vector<2x64xi1>
    %96 = arith.andi %64, %95 : vector<2x64xi1>
    %c4_i32 = arith.constant 4 : i32
    %97 = vector.broadcast %c4_i32 : i32 to vector<2x1xi32>
    %98 = arith.cmpi sgt, %61, %97 : vector<2x1xi32>
    %99 = vector.broadcast %98 : vector<2x1xi1> to vector<2x64xi1>
    %100 = arith.andi %65, %99 : vector<2x64xi1>
    %101 = arith.ori %96, %100 : vector<2x64xi1>
    %c4_i32_40 = arith.constant 4 : i32
    %102 = vector.broadcast %c4_i32_40 : i32 to vector<2x1xi32>
    %103 = arith.cmpi sgt, %61, %102 : vector<2x1xi32>
    %104 = vector.broadcast %103 : vector<2x1xi1> to vector<2x64xi1>
    %105 = arith.andi %64, %104 : vector<2x64xi1>
    %c3_i32_41 = arith.constant 3 : i32
    %106 = vector.broadcast %c3_i32_41 : i32 to vector<2x1xi32>
    %107 = arith.cmpi sgt, %61, %106 : vector<2x1xi32>
    %108 = vector.broadcast %107 : vector<2x1xi1> to vector<2x64xi1>
    %109 = arith.andi %65, %108 : vector<2x64xi1>
    %110 = arith.ori %105, %109 : vector<2x64xi1>
    %c5_i32_42 = arith.constant 5 : i32
    %111 = vector.broadcast %c5_i32_42 : i32 to vector<2x1xi32>
    %112 = arith.cmpi sgt, %61, %111 : vector<2x1xi32>
    %113 = vector.broadcast %112 : vector<2x1xi1> to vector<2x64xi1>
    %114 = arith.andi %64, %113 : vector<2x64xi1>
    %c2_i32_43 = arith.constant 2 : i32
    %115 = vector.broadcast %c2_i32_43 : i32 to vector<2x1xi32>
    %116 = arith.cmpi sgt, %61, %115 : vector<2x1xi32>
    %117 = vector.broadcast %116 : vector<2x1xi1> to vector<2x64xi1>
    %118 = arith.andi %65, %117 : vector<2x64xi1>
    %119 = arith.ori %114, %118 : vector<2x64xi1>
    %c6_i32_44 = arith.constant 6 : i32
    %120 = vector.broadcast %c6_i32_44 : i32 to vector<2x1xi32>
    %121 = arith.cmpi sgt, %61, %120 : vector<2x1xi32>
    %122 = vector.broadcast %121 : vector<2x1xi1> to vector<2x64xi1>
    %123 = arith.andi %64, %122 : vector<2x64xi1>
    %c1_i32_45 = arith.constant 1 : i32
    %124 = vector.broadcast %c1_i32_45 : i32 to vector<2x1xi32>
    %125 = arith.cmpi sgt, %61, %124 : vector<2x1xi32>
    %126 = vector.broadcast %125 : vector<2x1xi1> to vector<2x64xi1>
    %127 = arith.andi %65, %126 : vector<2x64xi1>
    %128 = arith.ori %123, %127 : vector<2x64xi1>
    %c7_i32_46 = arith.constant 7 : i32
    %129 = vector.broadcast %c7_i32_46 : i32 to vector<2x1xi32>
    %130 = arith.cmpi sgt, %61, %129 : vector<2x1xi32>
    %131 = vector.broadcast %130 : vector<2x1xi1> to vector<2x64xi1>
    %132 = arith.andi %64, %131 : vector<2x64xi1>
    %c0_i32_47 = arith.constant 0 : i32
    %133 = vector.broadcast %c0_i32_47 : i32 to vector<2x1xi32>
    %134 = arith.cmpi sgt, %61, %133 : vector<2x1xi32>
    %135 = vector.broadcast %134 : vector<2x1xi1> to vector<2x64xi1>
    %136 = arith.andi %65, %135 : vector<2x64xi1>
    %137 = arith.ori %132, %136 : vector<2x64xi1>
    %138 = tpu.iota {dimensions = array<i32: 1>} : vector<2x256xi32>
    %c128_i32 = arith.constant 128 : i32
    %139 = vector.broadcast %c128_i32 : i32 to vector<2x256xi32>
    %140 = arith.cmpi sge, %138, %139 : vector<2x256xi32>
    %c192_i32 = arith.constant 192 : i32
    %141 = vector.broadcast %c192_i32 : i32 to vector<2x256xi32>
    %142 = arith.cmpi slt, %138, %141 : vector<2x256xi32>
    %143 = arith.andi %140, %142 : vector<2x256xi1>
    %c0_48 = arith.constant 0 : index
    %c0_49 = arith.constant 0 : index
    %144 = vector.load %arg7[%c0_48, %c0_49] : memref<64x256xbf16, #tpu.memory_space<vmem>>, vector<64x256xbf16>
    %cst_50 = arith.constant 0.000000e+00 : f32
    %145 = vector.broadcast %cst_50 : f32 to vector<2x64xf32>
    %cst_51 = arith.constant 0.000000e+00 : f32
    %146 = vector.broadcast %cst_51 : f32 to vector<2x64xf32>
    %c0_52 = arith.constant 0 : index
    %c0_53 = arith.constant 0 : index
    %c0_54 = arith.constant 0 : index
    %147 = vector.load %arg11[%c0_52, %c0_53, %c0_54] : memref<8x2x256xf32, #tpu.memory_space<vmem>>, vector<1x2x256xf32>
    %148 = vector.shape_cast %147 : vector<1x2x256xf32> to vector<2x256xf32>
    %149 = arith.truncf %145 : vector<2x64xf32> to vector<2x64xbf16>
    %cst_55 = arith.constant dense<0.000000e+00> : vector<2x256xf32>
    %150 = tpu.matmul %149, %144, %cst_55 {dimension_numbers = #tpu.dot_dimension_numbers<[1], [0], [0], [1], [0, 0, 1, 1], [], []>} : vector<2x64xbf16>, vector<64x256xbf16>, vector<2x256xf32> -> vector<2x256xf32>
    %151 = arith.addf %148, %150 : vector<2x256xf32>
    %152 = arith.negf %151 : vector<2x256xf32>
    %153 = math.exp %152 : vector<2x256xf32>
    %cst_56 = arith.constant 1.000000e+00 : f32
    %154 = vector.broadcast %cst_56 : f32 to vector<2x256xf32>
    %155 = arith.addf %154, %153 : vector<2x256xf32>
    %156 = arith.divf %154, %155 : vector<2x256xf32>
    %157 = math.tanh %151 : vector<2x256xf32>
    %158 = arith.select %143, %157, %156 : vector<2x256xi1>, vector<2x256xf32>
    %159 = vector.extract_strided_slice %158 {offsets = [0, 0], sizes = [2, 64], strides = [1, 1]} : vector<2x256xf32> to vector<2x64xf32>
    %160 = vector.extract_strided_slice %158 {offsets = [0, 64], sizes = [2, 64], strides = [1, 1]} : vector<2x256xf32> to vector<2x64xf32>
    %161 = vector.extract_strided_slice %158 {offsets = [0, 128], sizes = [2, 64], strides = [1, 1]} : vector<2x256xf32> to vector<2x64xf32>
    %162 = vector.extract_strided_slice %158 {offsets = [0, 192], sizes = [2, 64], strides = [1, 1]} : vector<2x256xf32> to vector<2x64xf32>
    %163 = arith.mulf %160, %146 : vector<2x64xf32>
    %164 = arith.mulf %159, %161 : vector<2x64xf32>
    %165 = arith.addf %163, %164 : vector<2x64xf32>
    %166 = math.tanh %165 : vector<2x64xf32>
    %167 = arith.mulf %162, %166 : vector<2x64xf32>
    %168 = arith.select %74, %167, %145 : vector<2x64xi1>, vector<2x64xf32>
    %169 = arith.select %74, %165, %146 : vector<2x64xi1>, vector<2x64xf32>
    %c1_57 = arith.constant 1 : index
    %c0_58 = arith.constant 0 : index
    %c0_59 = arith.constant 0 : index
    %170 = vector.load %arg11[%c1_57, %c0_58, %c0_59] : memref<8x2x256xf32, #tpu.memory_space<vmem>>, vector<1x2x256xf32>
    %171 = vector.shape_cast %170 : vector<1x2x256xf32> to vector<2x256xf32>
    %172 = arith.truncf %168 : vector<2x64xf32> to vector<2x64xbf16>
    %cst_60 = arith.constant dense<0.000000e+00> : vector<2x256xf32>
    %173 = tpu.matmul %172, %144, %cst_60 {dimension_numbers = #tpu.dot_dimension_numbers<[1], [0], [0], [1], [0, 0, 1, 1], [], []>} : vector<2x64xbf16>, vector<64x256xbf16>, vector<2x256xf32> -> vector<2x256xf32>
    %174 = arith.addf %171, %173 : vector<2x256xf32>
    %175 = arith.negf %174 : vector<2x256xf32>
    %176 = math.exp %175 : vector<2x256xf32>
    %cst_61 = arith.constant 1.000000e+00 : f32
    %177 = vector.broadcast %cst_61 : f32 to vector<2x256xf32>
    %178 = arith.addf %177, %176 : vector<2x256xf32>
    %179 = arith.divf %177, %178 : vector<2x256xf32>
    %180 = math.tanh %174 : vector<2x256xf32>
    %181 = arith.select %143, %180, %179 : vector<2x256xi1>, vector<2x256xf32>
    %182 = vector.extract_strided_slice %181 {offsets = [0, 0], sizes = [2, 64], strides = [1, 1]} : vector<2x256xf32> to vector<2x64xf32>
    %183 = vector.extract_strided_slice %181 {offsets = [0, 64], sizes = [2, 64], strides = [1, 1]} : vector<2x256xf32> to vector<2x64xf32>
    %184 = vector.extract_strided_slice %181 {offsets = [0, 128], sizes = [2, 64], strides = [1, 1]} : vector<2x256xf32> to vector<2x64xf32>
    %185 = vector.extract_strided_slice %181 {offsets = [0, 192], sizes = [2, 64], strides = [1, 1]} : vector<2x256xf32> to vector<2x64xf32>
    %186 = arith.mulf %183, %169 : vector<2x64xf32>
    %187 = arith.mulf %182, %184 : vector<2x64xf32>
    %188 = arith.addf %186, %187 : vector<2x64xf32>
    %189 = math.tanh %188 : vector<2x64xf32>
    %190 = arith.mulf %185, %189 : vector<2x64xf32>
    %191 = arith.select %83, %190, %168 : vector<2x64xi1>, vector<2x64xf32>
    %192 = arith.select %83, %188, %169 : vector<2x64xi1>, vector<2x64xf32>
    %c2_62 = arith.constant 2 : index
    %c0_63 = arith.constant 0 : index
    %c0_64 = arith.constant 0 : index
    %193 = vector.load %arg11[%c2_62, %c0_63, %c0_64] : memref<8x2x256xf32, #tpu.memory_space<vmem>>, vector<1x2x256xf32>
    %194 = vector.shape_cast %193 : vector<1x2x256xf32> to vector<2x256xf32>
    %195 = arith.truncf %191 : vector<2x64xf32> to vector<2x64xbf16>
    %cst_65 = arith.constant dense<0.000000e+00> : vector<2x256xf32>
    %196 = tpu.matmul %195, %144, %cst_65 {dimension_numbers = #tpu.dot_dimension_numbers<[1], [0], [0], [1], [0, 0, 1, 1], [], []>} : vector<2x64xbf16>, vector<64x256xbf16>, vector<2x256xf32> -> vector<2x256xf32>
    %197 = arith.addf %194, %196 : vector<2x256xf32>
    %198 = arith.negf %197 : vector<2x256xf32>
    %199 = math.exp %198 : vector<2x256xf32>
    %cst_66 = arith.constant 1.000000e+00 : f32
    %200 = vector.broadcast %cst_66 : f32 to vector<2x256xf32>
    %201 = arith.addf %200, %199 : vector<2x256xf32>
    %202 = arith.divf %200, %201 : vector<2x256xf32>
    %203 = math.tanh %197 : vector<2x256xf32>
    %204 = arith.select %143, %203, %202 : vector<2x256xi1>, vector<2x256xf32>
    %205 = vector.extract_strided_slice %204 {offsets = [0, 0], sizes = [2, 64], strides = [1, 1]} : vector<2x256xf32> to vector<2x64xf32>
    %206 = vector.extract_strided_slice %204 {offsets = [0, 64], sizes = [2, 64], strides = [1, 1]} : vector<2x256xf32> to vector<2x64xf32>
    %207 = vector.extract_strided_slice %204 {offsets = [0, 128], sizes = [2, 64], strides = [1, 1]} : vector<2x256xf32> to vector<2x64xf32>
    %208 = vector.extract_strided_slice %204 {offsets = [0, 192], sizes = [2, 64], strides = [1, 1]} : vector<2x256xf32> to vector<2x64xf32>
    %209 = arith.mulf %206, %192 : vector<2x64xf32>
    %210 = arith.mulf %205, %207 : vector<2x64xf32>
    %211 = arith.addf %209, %210 : vector<2x64xf32>
    %212 = math.tanh %211 : vector<2x64xf32>
    %213 = arith.mulf %208, %212 : vector<2x64xf32>
    %214 = arith.select %92, %213, %191 : vector<2x64xi1>, vector<2x64xf32>
    %215 = arith.select %92, %211, %192 : vector<2x64xi1>, vector<2x64xf32>
    %c3_67 = arith.constant 3 : index
    %c0_68 = arith.constant 0 : index
    %c0_69 = arith.constant 0 : index
    %216 = vector.load %arg11[%c3_67, %c0_68, %c0_69] : memref<8x2x256xf32, #tpu.memory_space<vmem>>, vector<1x2x256xf32>
    %217 = vector.shape_cast %216 : vector<1x2x256xf32> to vector<2x256xf32>
    %218 = arith.truncf %214 : vector<2x64xf32> to vector<2x64xbf16>
    %cst_70 = arith.constant dense<0.000000e+00> : vector<2x256xf32>
    %219 = tpu.matmul %218, %144, %cst_70 {dimension_numbers = #tpu.dot_dimension_numbers<[1], [0], [0], [1], [0, 0, 1, 1], [], []>} : vector<2x64xbf16>, vector<64x256xbf16>, vector<2x256xf32> -> vector<2x256xf32>
    %220 = arith.addf %217, %219 : vector<2x256xf32>
    %221 = arith.negf %220 : vector<2x256xf32>
    %222 = math.exp %221 : vector<2x256xf32>
    %cst_71 = arith.constant 1.000000e+00 : f32
    %223 = vector.broadcast %cst_71 : f32 to vector<2x256xf32>
    %224 = arith.addf %223, %222 : vector<2x256xf32>
    %225 = arith.divf %223, %224 : vector<2x256xf32>
    %226 = math.tanh %220 : vector<2x256xf32>
    %227 = arith.select %143, %226, %225 : vector<2x256xi1>, vector<2x256xf32>
    %228 = vector.extract_strided_slice %227 {offsets = [0, 0], sizes = [2, 64], strides = [1, 1]} : vector<2x256xf32> to vector<2x64xf32>
    %229 = vector.extract_strided_slice %227 {offsets = [0, 64], sizes = [2, 64], strides = [1, 1]} : vector<2x256xf32> to vector<2x64xf32>
    %230 = vector.extract_strided_slice %227 {offsets = [0, 128], sizes = [2, 64], strides = [1, 1]} : vector<2x256xf32> to vector<2x64xf32>
    %231 = vector.extract_strided_slice %227 {offsets = [0, 192], sizes = [2, 64], strides = [1, 1]} : vector<2x256xf32> to vector<2x64xf32>
    %232 = arith.mulf %229, %215 : vector<2x64xf32>
    %233 = arith.mulf %228, %230 : vector<2x64xf32>
    %234 = arith.addf %232, %233 : vector<2x64xf32>
    %235 = math.tanh %234 : vector<2x64xf32>
    %236 = arith.mulf %231, %235 : vector<2x64xf32>
    %237 = arith.select %101, %236, %214 : vector<2x64xi1>, vector<2x64xf32>
    %238 = arith.select %101, %234, %215 : vector<2x64xi1>, vector<2x64xf32>
    %c4_72 = arith.constant 4 : index
    %c0_73 = arith.constant 0 : index
    %c0_74 = arith.constant 0 : index
    %239 = vector.load %arg11[%c4_72, %c0_73, %c0_74] : memref<8x2x256xf32, #tpu.memory_space<vmem>>, vector<1x2x256xf32>
    %240 = vector.shape_cast %239 : vector<1x2x256xf32> to vector<2x256xf32>
    %241 = arith.truncf %237 : vector<2x64xf32> to vector<2x64xbf16>
    %cst_75 = arith.constant dense<0.000000e+00> : vector<2x256xf32>
    %242 = tpu.matmul %241, %144, %cst_75 {dimension_numbers = #tpu.dot_dimension_numbers<[1], [0], [0], [1], [0, 0, 1, 1], [], []>} : vector<2x64xbf16>, vector<64x256xbf16>, vector<2x256xf32> -> vector<2x256xf32>
    %243 = arith.addf %240, %242 : vector<2x256xf32>
    %244 = arith.negf %243 : vector<2x256xf32>
    %245 = math.exp %244 : vector<2x256xf32>
    %cst_76 = arith.constant 1.000000e+00 : f32
    %246 = vector.broadcast %cst_76 : f32 to vector<2x256xf32>
    %247 = arith.addf %246, %245 : vector<2x256xf32>
    %248 = arith.divf %246, %247 : vector<2x256xf32>
    %249 = math.tanh %243 : vector<2x256xf32>
    %250 = arith.select %143, %249, %248 : vector<2x256xi1>, vector<2x256xf32>
    %251 = vector.extract_strided_slice %250 {offsets = [0, 0], sizes = [2, 64], strides = [1, 1]} : vector<2x256xf32> to vector<2x64xf32>
    %252 = vector.extract_strided_slice %250 {offsets = [0, 64], sizes = [2, 64], strides = [1, 1]} : vector<2x256xf32> to vector<2x64xf32>
    %253 = vector.extract_strided_slice %250 {offsets = [0, 128], sizes = [2, 64], strides = [1, 1]} : vector<2x256xf32> to vector<2x64xf32>
    %254 = vector.extract_strided_slice %250 {offsets = [0, 192], sizes = [2, 64], strides = [1, 1]} : vector<2x256xf32> to vector<2x64xf32>
    %255 = arith.mulf %252, %238 : vector<2x64xf32>
    %256 = arith.mulf %251, %253 : vector<2x64xf32>
    %257 = arith.addf %255, %256 : vector<2x64xf32>
    %258 = math.tanh %257 : vector<2x64xf32>
    %259 = arith.mulf %254, %258 : vector<2x64xf32>
    %260 = arith.select %110, %259, %237 : vector<2x64xi1>, vector<2x64xf32>
    %261 = arith.select %110, %257, %238 : vector<2x64xi1>, vector<2x64xf32>
    %c5_77 = arith.constant 5 : index
    %c0_78 = arith.constant 0 : index
    %c0_79 = arith.constant 0 : index
    %262 = vector.load %arg11[%c5_77, %c0_78, %c0_79] : memref<8x2x256xf32, #tpu.memory_space<vmem>>, vector<1x2x256xf32>
    %263 = vector.shape_cast %262 : vector<1x2x256xf32> to vector<2x256xf32>
    %264 = arith.truncf %260 : vector<2x64xf32> to vector<2x64xbf16>
    %cst_80 = arith.constant dense<0.000000e+00> : vector<2x256xf32>
    %265 = tpu.matmul %264, %144, %cst_80 {dimension_numbers = #tpu.dot_dimension_numbers<[1], [0], [0], [1], [0, 0, 1, 1], [], []>} : vector<2x64xbf16>, vector<64x256xbf16>, vector<2x256xf32> -> vector<2x256xf32>
    %266 = arith.addf %263, %265 : vector<2x256xf32>
    %267 = arith.negf %266 : vector<2x256xf32>
    %268 = math.exp %267 : vector<2x256xf32>
    %cst_81 = arith.constant 1.000000e+00 : f32
    %269 = vector.broadcast %cst_81 : f32 to vector<2x256xf32>
    %270 = arith.addf %269, %268 : vector<2x256xf32>
    %271 = arith.divf %269, %270 : vector<2x256xf32>
    %272 = math.tanh %266 : vector<2x256xf32>
    %273 = arith.select %143, %272, %271 : vector<2x256xi1>, vector<2x256xf32>
    %274 = vector.extract_strided_slice %273 {offsets = [0, 0], sizes = [2, 64], strides = [1, 1]} : vector<2x256xf32> to vector<2x64xf32>
    %275 = vector.extract_strided_slice %273 {offsets = [0, 64], sizes = [2, 64], strides = [1, 1]} : vector<2x256xf32> to vector<2x64xf32>
    %276 = vector.extract_strided_slice %273 {offsets = [0, 128], sizes = [2, 64], strides = [1, 1]} : vector<2x256xf32> to vector<2x64xf32>
    %277 = vector.extract_strided_slice %273 {offsets = [0, 192], sizes = [2, 64], strides = [1, 1]} : vector<2x256xf32> to vector<2x64xf32>
    %278 = arith.mulf %275, %261 : vector<2x64xf32>
    %279 = arith.mulf %274, %276 : vector<2x64xf32>
    %280 = arith.addf %278, %279 : vector<2x64xf32>
    %281 = math.tanh %280 : vector<2x64xf32>
    %282 = arith.mulf %277, %281 : vector<2x64xf32>
    %283 = arith.select %119, %282, %260 : vector<2x64xi1>, vector<2x64xf32>
    %284 = arith.select %119, %280, %261 : vector<2x64xi1>, vector<2x64xf32>
    %c6_82 = arith.constant 6 : index
    %c0_83 = arith.constant 0 : index
    %c0_84 = arith.constant 0 : index
    %285 = vector.load %arg11[%c6_82, %c0_83, %c0_84] : memref<8x2x256xf32, #tpu.memory_space<vmem>>, vector<1x2x256xf32>
    %286 = vector.shape_cast %285 : vector<1x2x256xf32> to vector<2x256xf32>
    %287 = arith.truncf %283 : vector<2x64xf32> to vector<2x64xbf16>
    %cst_85 = arith.constant dense<0.000000e+00> : vector<2x256xf32>
    %288 = tpu.matmul %287, %144, %cst_85 {dimension_numbers = #tpu.dot_dimension_numbers<[1], [0], [0], [1], [0, 0, 1, 1], [], []>} : vector<2x64xbf16>, vector<64x256xbf16>, vector<2x256xf32> -> vector<2x256xf32>
    %289 = arith.addf %286, %288 : vector<2x256xf32>
    %290 = arith.negf %289 : vector<2x256xf32>
    %291 = math.exp %290 : vector<2x256xf32>
    %cst_86 = arith.constant 1.000000e+00 : f32
    %292 = vector.broadcast %cst_86 : f32 to vector<2x256xf32>
    %293 = arith.addf %292, %291 : vector<2x256xf32>
    %294 = arith.divf %292, %293 : vector<2x256xf32>
    %295 = math.tanh %289 : vector<2x256xf32>
    %296 = arith.select %143, %295, %294 : vector<2x256xi1>, vector<2x256xf32>
    %297 = vector.extract_strided_slice %296 {offsets = [0, 0], sizes = [2, 64], strides = [1, 1]} : vector<2x256xf32> to vector<2x64xf32>
    %298 = vector.extract_strided_slice %296 {offsets = [0, 64], sizes = [2, 64], strides = [1, 1]} : vector<2x256xf32> to vector<2x64xf32>
    %299 = vector.extract_strided_slice %296 {offsets = [0, 128], sizes = [2, 64], strides = [1, 1]} : vector<2x256xf32> to vector<2x64xf32>
    %300 = vector.extract_strided_slice %296 {offsets = [0, 192], sizes = [2, 64], strides = [1, 1]} : vector<2x256xf32> to vector<2x64xf32>
    %301 = arith.mulf %298, %284 : vector<2x64xf32>
    %302 = arith.mulf %297, %299 : vector<2x64xf32>
    %303 = arith.addf %301, %302 : vector<2x64xf32>
    %304 = math.tanh %303 : vector<2x64xf32>
    %305 = arith.mulf %300, %304 : vector<2x64xf32>
    %306 = arith.select %128, %305, %283 : vector<2x64xi1>, vector<2x64xf32>
    %307 = arith.select %128, %303, %284 : vector<2x64xi1>, vector<2x64xf32>
    %c7_87 = arith.constant 7 : index
    %c0_88 = arith.constant 0 : index
    %c0_89 = arith.constant 0 : index
    %308 = vector.load %arg11[%c7_87, %c0_88, %c0_89] : memref<8x2x256xf32, #tpu.memory_space<vmem>>, vector<1x2x256xf32>
    %309 = vector.shape_cast %308 : vector<1x2x256xf32> to vector<2x256xf32>
    %310 = arith.truncf %306 : vector<2x64xf32> to vector<2x64xbf16>
    %cst_90 = arith.constant dense<0.000000e+00> : vector<2x256xf32>
    %311 = tpu.matmul %310, %144, %cst_90 {dimension_numbers = #tpu.dot_dimension_numbers<[1], [0], [0], [1], [0, 0, 1, 1], [], []>} : vector<2x64xbf16>, vector<64x256xbf16>, vector<2x256xf32> -> vector<2x256xf32>
    %312 = arith.addf %309, %311 : vector<2x256xf32>
    %313 = arith.negf %312 : vector<2x256xf32>
    %314 = math.exp %313 : vector<2x256xf32>
    %cst_91 = arith.constant 1.000000e+00 : f32
    %315 = vector.broadcast %cst_91 : f32 to vector<2x256xf32>
    %316 = arith.addf %315, %314 : vector<2x256xf32>
    %317 = arith.divf %315, %316 : vector<2x256xf32>
    %318 = math.tanh %312 : vector<2x256xf32>
    %319 = arith.select %143, %318, %317 : vector<2x256xi1>, vector<2x256xf32>
    %320 = vector.extract_strided_slice %319 {offsets = [0, 0], sizes = [2, 64], strides = [1, 1]} : vector<2x256xf32> to vector<2x64xf32>
    %321 = vector.extract_strided_slice %319 {offsets = [0, 64], sizes = [2, 64], strides = [1, 1]} : vector<2x256xf32> to vector<2x64xf32>
    %322 = vector.extract_strided_slice %319 {offsets = [0, 128], sizes = [2, 64], strides = [1, 1]} : vector<2x256xf32> to vector<2x64xf32>
    %323 = vector.extract_strided_slice %319 {offsets = [0, 192], sizes = [2, 64], strides = [1, 1]} : vector<2x256xf32> to vector<2x64xf32>
    %324 = arith.mulf %321, %307 : vector<2x64xf32>
    %325 = arith.mulf %320, %322 : vector<2x64xf32>
    %326 = arith.addf %324, %325 : vector<2x64xf32>
    %327 = math.tanh %326 : vector<2x64xf32>
    %328 = arith.mulf %323, %327 : vector<2x64xf32>
    %329 = arith.select %137, %328, %306 : vector<2x64xi1>, vector<2x64xf32>
    %330 = arith.truncf %329 : vector<2x64xf32> to vector<2x64xbf16>
    %c0_92 = arith.constant 0 : index
    %c0_93 = arith.constant 0 : index
    %331 = vector.load %arg8[%c0_92, %c0_93] : memref<64x30xbf16, #tpu.memory_space<vmem>>, vector<64x30xbf16>
    %cst_94 = arith.constant dense<0.000000e+00> : vector<2x30xf32>
    %332 = tpu.matmul %330, %331, %cst_94 {dimension_numbers = #tpu.dot_dimension_numbers<[1], [0], [0], [1], [0, 0, 1, 1], [], []>} : vector<2x64xbf16>, vector<64x30xbf16>, vector<2x30xf32> -> vector<2x30xf32>
    %c0_95 = arith.constant 0 : index
    %c0_96 = arith.constant 0 : index
    %333 = vector.load %arg9[%c0_95, %c0_96] : memref<1x30xf32, #tpu.memory_space<vmem>>, vector<1x30xf32>
    %334 = vector.broadcast %333 : vector<1x30xf32> to vector<2x30xf32>
    %335 = arith.addf %332, %334 : vector<2x30xf32>
    %336 = tpu.iota {dimensions = array<i32: 0>} : vector<30x30xi32>
    %337 = tpu.iota {dimensions = array<i32: 1>} : vector<30x30xi32>
    %c0_i32_97 = arith.constant 0 : i32
    %338 = vector.broadcast %c0_i32_97 : i32 to vector<30x30xi32>
    %c0_i32_98 = arith.constant 0 : i32
    %339 = vector.broadcast %c0_i32_98 : i32 to vector<30x30xi32>
    %c8_i32 = arith.constant 8 : i32
    %340 = vector.broadcast %c8_i32 : i32 to vector<30x30xi32>
    %341 = arith.cmpi sge, %336, %340 : vector<30x30xi32>
    %342 = arith.extui %341 : vector<30x30xi1> to vector<30x30xi32>
    %343 = arith.addi %338, %342 : vector<30x30xi32>
    %c8_i32_99 = arith.constant 8 : i32
    %344 = vector.broadcast %c8_i32_99 : i32 to vector<30x30xi32>
    %345 = arith.cmpi sge, %337, %344 : vector<30x30xi32>
    %346 = arith.extui %345 : vector<30x30xi1> to vector<30x30xi32>
    %347 = arith.addi %339, %346 : vector<30x30xi32>
    %c12_i32 = arith.constant 12 : i32
    %348 = vector.broadcast %c12_i32 : i32 to vector<30x30xi32>
    %349 = arith.cmpi sge, %336, %348 : vector<30x30xi32>
    %350 = arith.extui %349 : vector<30x30xi1> to vector<30x30xi32>
    %351 = arith.addi %343, %350 : vector<30x30xi32>
    %c12_i32_100 = arith.constant 12 : i32
    %352 = vector.broadcast %c12_i32_100 : i32 to vector<30x30xi32>
    %353 = arith.cmpi sge, %337, %352 : vector<30x30xi32>
    %354 = arith.extui %353 : vector<30x30xi1> to vector<30x30xi32>
    %355 = arith.addi %347, %354 : vector<30x30xi32>
    %c18_i32 = arith.constant 18 : i32
    %356 = vector.broadcast %c18_i32 : i32 to vector<30x30xi32>
    %357 = arith.cmpi sge, %336, %356 : vector<30x30xi32>
    %358 = arith.extui %357 : vector<30x30xi1> to vector<30x30xi32>
    %359 = arith.addi %351, %358 : vector<30x30xi32>
    %c18_i32_101 = arith.constant 18 : i32
    %360 = vector.broadcast %c18_i32_101 : i32 to vector<30x30xi32>
    %361 = arith.cmpi sge, %337, %360 : vector<30x30xi32>
    %362 = arith.extui %361 : vector<30x30xi1> to vector<30x30xi32>
    %363 = arith.addi %355, %362 : vector<30x30xi32>
    %364 = arith.cmpi eq, %359, %363 : vector<30x30xi32>
    %365 = arith.extui %364 : vector<30x30xi1> to vector<30x30xi32>
    %366 = arith.sitofp %365 : vector<30x30xi32> to vector<30x30xf32>
    %cst_102 = arith.constant dense<0xFF800000> : vector<2xf32>
    %367 = vector.multi_reduction <maximumf>, %335, %cst_102 [1] : vector<2x30xf32> to vector<2xf32>
    %368 = vector.shape_cast %367 : vector<2xf32> to vector<2x1xf32>
    %369 = vector.broadcast %368 : vector<2x1xf32> to vector<2x30xf32>
    %370 = arith.subf %335, %369 : vector<2x30xf32>
    %371 = math.exp %370 : vector<2x30xf32>
    %cst_103 = arith.constant dense<0.000000e+00> : vector<2x30xf32>
    %372 = tpu.matmul %371, %366, %cst_103 {dimension_numbers = #tpu.dot_dimension_numbers<[1], [0], [0], [1], [0, 0, 1, 1], [], []>} : vector<2x30xf32>, vector<30x30xf32>, vector<2x30xf32> -> vector<2x30xf32>
    %373 = tpu.reciprocal %372 : vector<2x30xf32> -> vector<2x30xf32>
    %374 = arith.mulf %371, %373 : vector<2x30xf32>
    %c0_104 = arith.constant 0 : index
    %c0_105 = arith.constant 0 : index
    %375 = vector.load %arg10[%c0_104, %c0_105] : memref<2x30xf32, #tpu.memory_space<vmem>>, vector<2x30xf32>
    tpu.vector_store %arg10[%c0_104, %c0_105], %374 {strides = array<i32>} : memref<2x30xf32, #tpu.memory_space<vmem>>, vector<2x30xf32>,
    return
  }
}

</mosaic_0001>

<llo_original>
// kernel: classifier_forward.1
$region0: #{classifier_forward.1}
  #allocation0 [shape = 'u32[]', space=smem, size = 0x4, offset = 0x4, fixed_abs, tag = 'smem constant byte address 0x4 - core index']
  #allocation1 [shape = 'u32[72,128]{1,0:T(1,128)}', space=vmem, size = 0x9000, scoped, tag = 'internal scratch']
  #allocation2 [shape = 'f32[8,2,256]{2,1,0:T(2,128)}', space=vmem, size = 0x4000, scoped, tag = 'scratch operand']
  %s0 = inlined_call_operand.vmem [shape: s32[16,1], index: 0, kind: input, shape index: {}]
  %s1 = inlined_call_operand.vmem [shape: s32[16,1], index: 1, kind: input, shape index: {}]
  %s2 = inlined_call_operand.vmem [shape: s32[2,1], index: 2, kind: input, shape index: {}]
  %s3 = inlined_call_operand.vmem [shape: bf16[50,30], index: 3, kind: input, shape index: {}]
  %s4 = inlined_call_operand.vmem [shape: bf16[30,256], index: 4, kind: input, shape index: {}]
  %s5 = inlined_call_operand.hbm [shape: bf16[30,256], index: 5, kind: input, shape index: {}]
  %s6 = inlined_call_operand.vmem [shape: f32[1,256], index: 6, kind: input, shape index: {}]
  %s7 = inlined_call_operand.vmem [shape: bf16[64,256], index: 7, kind: input, shape index: {}]
  %s8 = inlined_call_operand.vmem [shape: bf16[64,30], index: 8, kind: input, shape index: {}]
  %s9 = inlined_call_operand.vmem [shape: f32[1,30], index: 9, kind: input, shape index: {}]
  %s10 = inlined_call_operand.vmem [shape: f32[2,30], index: 10, kind: output, shape index: {}]
  %s11 = sld [smem:[#allocation0]]
  $region54: #{classifier_forward.1} parent=0
    _
  %s13 = ssub.s32 1, %s11
  %s14 = scalar_select 0, %s13, %s11
  $region1: #{classifier_forward.1} parent=0
    #allocation3 [shape = 'u8[16384]{0}', space=vmem, size = 0x4000, scoped, tag = 'input window, operand 5, single buffered']
    #allocation4 [shape = 's32[1]{0}', space=sflag, size = 0x4, scoped, tag = 'scoped memory for classifier_forward.1']
    %15 = vsyncpa [#allocation4], 0
    // Predicated region
    $region2: #{classifier_forward.1} parent=1 // pred_check
      _
    $region3: #{classifier_forward.1} parent=1 // pred_check_branch
      %17 = sbr.rel (0) target = $region5
    $region4: #{classifier_forward.1} parent=1 // pred_region
      _
    $region5: #{classifier_forward.1} parent=1 // pred_fallthru
      _
    // Predicated region
    $region6: #{classifier_forward.1} parent=1 // pred_check
      _
    $region7: #{classifier_forward.1} parent=1 // pred_check_branch
      %19 = sbr.rel (0) target = $region9
    $region8: #{classifier_forward.1} parent=1 // pred_region
      _
    $region9: #{classifier_forward.1} parent=1 // pred_fallthru
      _
    // Predicated region
    $region10: #{classifier_forward.1} parent=1 // pred_check
      _
    $region11: #{classifier_forward.1} parent=1 // pred_check_branch
      %21 = sbr.rel (0) target = $region13
    $region12: #{classifier_forward.1} parent=1 // pred_region
      _
    $region13: #{classifier_forward.1} parent=1 // pred_fallthru
      _
    // Predicated region
    $region14: #{classifier_forward.1} parent=1 // pred_check
      _
    $region15: #{classifier_forward.1} parent=1 // pred_check_branch
      %23 = sbr.rel (0) target = $region17
    $region16: #{classifier_forward.1} parent=1 // pred_region
      _
    $region17: #{classifier_forward.1} parent=1 // pred_fallthru
      _
    // Predicated region
    $region18: #{classifier_forward.1} parent=1 // pred_check
      _
    $region19: #{classifier_forward.1} parent=1 // pred_check_branch
      %25 = sbr.rel (0) target = $region21
    $region20: #{classifier_forward.1} parent=1 // pred_region
      _
    $region21: #{classifier_forward.1} parent=1 // pred_fallthru
      _
    // Predicated region
    $region22: #{classifier_forward.1} parent=1 // pred_check
      _
    $region23: #{classifier_forward.1} parent=1 // pred_check_branch
      %27 = sbr.rel (0) target = $region25
    $region24: #{classifier_forward.1} parent=1 // pred_region
      %29 = vsyncadd [#allocation4], 0
      %s30 = sshll.u32 %s5, 4
      %s31 = int_to_ptr.hbm [resolvable:$true] %s30
      %s32 = sshll.u32 [#allocation3], 4
      %s33 = int_to_ptr.vmem [resolvable:$true] %s32
      %38 = dma.hbm_to_vmem [thread:$0]  %s31, 512, %s33, [#allocation4], 128, 128, 8
    $region25: #{classifier_forward.1} parent=1 // pred_fallthru
      _
    // Predicated region
    $region26: #{classifier_forward.1} parent=1 // pred_check
      _
    $region27: #{classifier_forward.1} parent=1 // pred_check_branch
      %40 = sbr.rel (0) target = $region29
    $region28: #{classifier_forward.1} parent=1 // pred_region
      _
    $region29: #{classifier_forward.1} parent=1 // pred_fallthru
      _
    // Predicated region
    $region30: #{classifier_forward.1} parent=1 // pred_check
      _
    $region31: #{classifier_forward.1} parent=1 // pred_check_branch
      %42 = sbr.rel (0) target = $region33
    $region32: #{classifier_forward.1} parent=1 // pred_region
      _
    $region33: #{classifier_forward.1} parent=1 // pred_fallthru
      _
    // Predicated region
    $region34: #{classifier_forward.1} parent=1 // pred_check
      _
    $region35: #{classifier_forward.1} parent=1 // pred_check_branch
      %44 = sbr.rel (0) target = $region37
    $region36: #{classifier_forward.1} parent=1 // pred_region
      _
    $region37: #{classifier_forward.1} parent=1 // pred_fallthru
      _
    // Predicated region
    $region38: #{classifier_forward.1} parent=1 // pred_check
      _
    $region39: #{classifier_forward.1} parent=1 // pred_check_branch
      %46 = sbr.rel (0) target = $region41
    $region40: #{classifier_forward.1} parent=1 // pred_region
      _
    $region41: #{classifier_forward.1} parent=1 // pred_fallthru
      _
    // Predicated region
    $region42: #{classifier_forward.1} parent=1 // pred_check
      _
    $region43: #{classifier_forward.1} parent=1 // pred_check_branch
      %48 = sbr.rel (0) target = $region45
    $region44: #{classifier_forward.1} parent=1 // pred_region
      %50 = dma.done [#allocation4], 512
    $region45: #{classifier_forward.1} parent=1 // pred_fallthru
      _
    %v52 = vlaneseq
    %v53 = vand.u32 %v52, 127
    %v54 = vld [vmem:[%s0] sm:$0xff]
    %v55 = vld [vmem:[%s0 + $0x8] sm:$0xff]
    %56 = vset.pattern.permute.xlu0 0
    %57 = vperm.xlu0 %56, %v54
    %v58 = vpop.permute.xlu0 %57
    %59 = vset.pattern.permute.xlu0 0
    %60 = vperm.xlu0 %59, %v55
    %v61 = vpop.permute.xlu0 %60
    %vm62 = vcmp.eq.s32.totalorder %v53, %v58
    %vm63 = vcmp.eq.s32.totalorder %v53, %v61
    %v64 = vsel %vm62, 1.0, 0.0
    %v65 = vsel %vm63, 1.0, 0.0
    %v66 = vpack.c.bf16 %v65, %v64
    %v67 = vld [vmem:[%s1] sm:$0xff]
    %v68 = vld [vmem:[%s1 + $0x8] sm:$0xff]
    %69 = vset.pattern.permute.xlu0 0
    %70 = vperm.xlu0 %69, %v67
    %v71 = vpop.permute.xlu0 %70
    %72 = vset.pattern.permute.xlu0 0
    %73 = vperm.xlu0 %72, %v68
    %v74 = vpop.permute.xlu0 %73
    %vm75 = vcmp.eq.s32.totalorder %v53, %v71
    %vm76 = vcmp.eq.s32.totalorder %v53, %v74
    %v77 = vsel %vm75, 1.0, 0.0
    %v78 = vsel %vm76, 1.0, 0.0
    %v79 = vpack.c.bf16 %v78, %v77
    %v80 = vld [vmem:[%s3] sm:$0xf]
    %v81 = vld [vmem:[%s3 + $0x4] sm:$0xf]
    %v82 = vld [vmem:[%s3 + $0x8] sm:$0xf]
    %v83 = vld [vmem:[%s3 + $0xc] sm:$0xf]
    %v84 = vld [vmem:[%s3 + $0x10] sm:$0xf]
    %v85 = vld [vmem:[%s3 + $0x14] sm:$0xf]
    %v86 = vld [vmem:[%s3 + $0x18] sm:$0x1]
    %v94 = vunpack.c.l.b16 %v80
    %v95 = vunpack.c.l.b16 %v81
    %v96 = vunpack.c.l.b16 %v82
    %v97 = vunpack.c.l.b16 %v83
    %v98 = vunpack.c.l.b16 %v84
    %v99 = vunpack.c.l.b16 %v85
    %v100 = vunpack.c.l.b16 %v86
    %v101 = vpack.c.b16 %v95, %v94
    %v102 = vpack.c.b16 %v97, %v96
    %v103 = vpack.c.b16 %v99, %v98
    %v104 = vpack.c.b16 %v100, %v100
    %vm108 = vcmask 408576
    %v110 = vsel %vm108, %v66, 0
    %vm112 = vcmask 1040384
    %v114 = vsel %vm112, %v104, 0
    %116 = vmatpush.bf16.msra.mxu0 0
    %117 = vmatpush.bf16.msra.mxu0 0
    %118 = vmatpush.bf16.msra.mxu0 0
    %119 = vmatpush.bf16.msra.mxu0 0
    %120 = vmatpush.bf16.msra.mxu0 %v114
    %121 = vmatpush.bf16.msra.mxu0 %v103
    %122 = vmatpush.bf16.msra.mxu0 %v102
    %123 = vmatpush.bf16.msra.mxu0 %v101
    %124 = vmatmul.bf16.gmra.mxu0 %v110
    %v125 = vpop.f32.mrf.mxu0
    %v126 = vadd.f32 0.0, %v125
    %v127 = vpop.f32.mrf.mxu0
    %v128 = vadd.f32 0.0, %v127
    %129 = vdwg.mxu0
    %v130 = vpack.c.bf16 %v128, %v126
    %v132 = vsel %vm108, %v79, 0
    %134 = vmatpush.bf16.msra.mxu0 0
    %135 = vmatpush.bf16.msra.mxu0 0
    %136 = vmatpush.bf16.msra.mxu0 0
    %137 = vmatpush.bf16.msra.mxu0 0
    %138 = vmatpush.bf16.msra.mxu0 %v114
    %139 = vmatpush.bf16.msra.mxu0 %v103
    %140 = vmatpush.bf16.msra.mxu0 %v102
    %141 = vmatpush.bf16.msra.mxu0 %v101
    %142 = vmatmul.bf16.gmra.mxu0 %v132
    %v143 = vpop.f32.mrf.mxu0
    %v144 = vadd.f32 0.0, %v143
    %v145 = vpop.f32.mrf.mxu0
    %v146 = vadd.f32 0.0, %v145
    %147 = vdwg.mxu0
    %v148 = vpack.c.bf16 %v146, %v144
    %v149 = vld [vmem:[%s4] sm:$0xff]
    %v150 = vld [vmem:[%s4 + $0x8] sm:$0xff]
    %v151 = vld [vmem:[%s4 + $0x10] sm:$0xff]
    %v152 = vld [vmem:[%s4 + $0x18] sm:$0x77]
    %v153 = vld [vmem:[#allocation3] sm:$0xff]
    %v154 = vld [vmem:[#allocation3 + $0x8] sm:$0xff]
    %v155 = vld [vmem:[#allocation3 + $0x10] sm:$0xff]
    %v156 = vld [vmem:[#allocation3 + $0x18] sm:$0x77]
    %v161 = vunpack.c.l.b16 %v153
    %v162 = vunpack.c.h.b16 %v153
    %v163 = vunpack.c.l.b16 %v154
    %v164 = vunpack.c.h.b16 %v154
    %v165 = vunpack.c.l.b16 %v155
    %v166 = vunpack.c.h.b16 %v155
    %v167 = vunpack.c.l.b16 %v156
    %v168 = vunpack.c.h.b16 %v156
    %v169 = vpack.c.b16 %v163, %v161
    %v170 = vpack.c.b16 %v164, %v162
    %v171 = vpack.c.b16 %v167, %v165
    %v172 = vpack.c.b16 %v168, %v166
    %vm175 = vcmask 244736
    %v177 = vsel %vm175, %v148, 0
    %vm179 = vcmask 1046528
    %v181 = vsel %vm179, %v171, 0
    %v184 = vsel %vm179, %v172, 0
    %186 = vmatpush.bf16.msra.mxu0 0
    %187 = vmatpush.bf16.msra.mxu0 0
    %188 = vmatpush.bf16.msra.mxu0 0
    %189 = vmatpush.bf16.msra.mxu0 0
    %190 = vmatpush.bf16.msra.mxu0 0
    %191 = vmatpush.bf16.msra.mxu0 0
    %192 = vmatpush.bf16.msra.mxu0 %v181
    %193 = vmatpush.bf16.msra.mxu0 %v169
    %194 = vmatmul.bf16.gmra.mxu0 %v177
    %v195 = vpop.f32.mrf.mxu0
    %v196 = vadd.f32 0.0, %v195
    %v197 = vpop.f32.mrf.mxu0
    %v198 = vadd.f32 0.0, %v197
    %199 = vdwg.mxu0
    %200 = vmatpush.bf16.msra.mxu0 0
    %201 = vmatpush.bf16.msra.mxu0 0
    %202 = vmatpush.bf16.msra.mxu0 0
    %203 = vmatpush.bf16.msra.mxu0 0
    %204 = vmatpush.bf16.msra.mxu0 0
    %205 = vmatpush.bf16.msra.mxu0 0
    %206 = vmatpush.bf16.msra.mxu0 %v184
    %207 = vmatpush.bf16.msra.mxu0 %v170
    %208 = vmatmul.bf16.gmra.mxu0 %v177
    %v209 = vpop.f32.mrf.mxu0
    %v210 = vadd.f32 0.0, %v209
    %v211 = vpop.f32.mrf.mxu0
    %v212 = vadd.f32 0.0, %v211
    %213 = vdwg.mxu0
    %v218 = vunpack.c.l.b16 %v149
    %v219 = vunpack.c.h.b16 %v149
    %v220 = vunpack.c.l.b16 %v150
    %v221 = vunpack.c.h.b16 %v150
    %v222 = vunpack.c.l.b16 %v151
    %v223 = vunpack.c.h.b16 %v151
    %v224 = vunpack.c.l.b16 %v152
    %v225 = vunpack.c.h.b16 %v152
    %v226 = vpack.c.b16 %v220, %v218
    %v227 = vpack.c.b16 %v221, %v219
    %v228 = vpack.c.b16 %v224, %v222
    %v229 = vpack.c.b16 %v225, %v223
    %v233 = vsel %vm175, %v130, 0
    %v236 = vsel %vm179, %v228, 0
    %v239 = vsel %vm179, %v229, 0
    %241 = vmatpush.bf16.msra.mxu0 0
    %242 = vmatpush.bf16.msra.mxu0 0
    %243 = vmatpush.bf16.msra.mxu0 0
    %244 = vmatpush.bf16.msra.mxu0 0
    %245 = vmatpush.bf16.msra.mxu0 0
    %246 = vmatpush.bf16.msra.mxu0 0
    %247 = vmatpush.bf16.msra.mxu0 %v236
    %248 = vmatpush.bf16.msra.mxu0 %v226
    %249 = vmatmul.bf16.gmra.mxu0 %v233
    %v250 = vpop.f32.mrf.mxu0
    %v251 = vadd.f32 %v196, %v250
    %v252 = vpop.f32.mrf.mxu0
    %v253 = vadd.f32 %v198, %v252
    %254 = vdwg.mxu0
    %255 = vmatpush.bf16.msra.mxu0 0
    %256 = vmatpush.bf16.msra.mxu0 0
    %257 = vmatpush.bf16.msra.mxu0 0
    %258 = vmatpush.bf16.msra.mxu0 0
    %259 = vmatpush.bf16.msra.mxu0 0
    %260 = vmatpush.bf16.msra.mxu0 0
    %261 = vmatpush.bf16.msra.mxu0 %v239
    %262 = vmatpush.bf16.msra.mxu0 %v227
    %263 = vmatmul.bf16.gmra.mxu0 %v233
    %v264 = vpop.f32.mrf.mxu0
    %v265 = vadd.f32 %v210, %v264
    %v266 = vpop.f32.mrf.mxu0
    %v267 = vadd.f32 %v212, %v266
    %268 = vdwg.mxu0
    %v269 = vld [vmem:[%s6] sm:$0x3]
    %v271 = vperm.slane %v269, 0
    %v272 = vperm.slane %v269, 1
    %v275 = vadd.f32 %v251, %v271
    %v276 = vadd.f32 %v265, %v272
    %v277 = vadd.f32 %v253, %v271
    %v278 = vadd.f32 %v267, %v272
    %v281 = vrot.slane %v276, 6
    %vm282 = vcmask 1041408
    %v283 = vsel %vm282, %v275, %v281
    %285 = vst [vmem:[#allocation2] sm:$0xf] %v283
    %286 = vst.sshfl [vmem:[#allocation1] sm:$0xff pattern:$0x73625140] %v275
    %287 = vst.sshfl [vmem:[#allocation1 + $0x8] sm:$0xff pattern:$0x73625140] %v276
    %s288 = scalar_lea.vmem [#allocation1], 1
    %v289 = vld [vmem:[%s288] ss:$4 sm:$0xff]
    %s291 = scalar_lea.vmem [#allocation2], 4
    %292 = vst [vmem:[%s291] sm:$0xf] %v289
    %293 = vst.sshfl [vmem:[#allocation1] sm:$0xff pattern:$0x73625140] %v275
    %294 = vst.sshfl [vmem:[#allocation1 + $0x8] sm:$0xff pattern:$0x73625140] %v276
    %s295 = scalar_lea.vmem [#allocation1], 2
    %v296 = vld [vmem:[%s295] ss:$4 sm:$0xff]
    %s298 = scalar_lea.vmem [#allocation2], 8
    %299 = vst [vmem:[%s298] sm:$0xf] %v296
    %300 = vst.sshfl [vmem:[#allocation1] sm:$0xff pattern:$0x73625140] %v275
    %301 = vst.sshfl [vmem:[#allocation1 + $0x8] sm:$0xff pattern:$0x73625140] %v276
    %s302 = scalar_lea.vmem [#allocation1], 3
    %v303 = vld [vmem:[%s302] ss:$4 sm:$0xff]
    %s305 = scalar_lea.vmem [#allocation2], 12
    %306 = vst [vmem:[%s305] sm:$0xf] %v303
    %v309 = vrot.slane %v278, 6
    %v310 = vsel %vm282, %v277, %v309
    %s312 = scalar_lea.vmem [#allocation2], 16
    %313 = vst [vmem:[%s312] sm:$0xf] %v310
    %314 = vst.sshfl [vmem:[#allocation1] sm:$0xff pattern:$0x73625140] %v277
    %315 = vst.sshfl [vmem:[#allocation1 + $0x8] sm:$0xff pattern:$0x73625140] %v278
    %s316 = scalar_lea.vmem [#allocation1], 1
    %v317 = vld [vmem:[%s316] ss:$4 sm:$0xff]
    %s319 = scalar_lea.vmem [#allocation2], 20
    %320 = vst [vmem:[%s319] sm:$0xf] %v317
    %321 = vst.sshfl [vmem:[#allocation1] sm:$0xff pattern:$0x73625140] %v277
    %322 = vst.sshfl [vmem:[#allocation1 + $0x8] sm:$0xff pattern:$0x73625140] %v278
    %s323 = scalar_lea.vmem [#allocation1], 2
    %v324 = vld [vmem:[%s323] ss:$4 sm:$0xff]
    %s326 = scalar_lea.vmem [#allocation2], 24
    %327 = vst [vmem:[%s326] sm:$0xf] %v324
    %328 = vst.sshfl [vmem:[#allocation1] sm:$0xff pattern:$0x73625140] %v277
    %329 = vst.sshfl [vmem:[#allocation1 + $0x8] sm:$0xff pattern:$0x73625140] %v278
    %s330 = scalar_lea.vmem [#allocation1], 3
    %v331 = vld [vmem:[%s330] ss:$4 sm:$0xff]
    %s333 = scalar_lea.vmem [#allocation2], 28
    %334 = vst [vmem:[%s333] sm:$0xf] %v331
    %v335 = vld [vmem:[%s2] sm:$0x3]
    %vm336 = vcmp.lt.s32.totalorder %v53, 32
    %vm337 = vmxor %vm336, 1
    %vm338 = vcmp.gt.s32.totalorder %v335, 0
    %v339 = vsel %vm338, 1, 0
    %340 = vset.pattern.permute.xlu0 0
    %341 = vperm.xlu0 %340, %v339
    %v342 = vpop.permute.xlu0 %341
    %vm343 = vcmp.eq.s32.totalorder %v342, 1
    %vm344 = vmand %vm336, %vm343
    %vm345 = vcmp.gt.s32.totalorder %v335, 7
    %v346 = vsel %vm345, 1, 0
    %347 = vset.pattern.permute.xlu0 0
    %348 = vperm.xlu0 %347, %v346
    %v349 = vpop.permute.xlu0 %348
    %vm350 = vcmp.eq.s32.totalorder %v349, 1
    %vm351 = vmand %vm337, %vm350
    %vm352 = vmor %vm344, %vm351
    %vm353 = vcmp.gt.s32.totalorder %v335, 1
    %v354 = vsel %vm353, 1, 0
    %355 = vset.pattern.permute.xlu0 0
    %356 = vperm.xlu0 %355, %v354
    %v357 = vpop.permute.xlu0 %356
    %vm358 = vcmp.eq.s32.totalorder %v357, 1
    %vm359 = vmand %vm336, %vm358
    %vm360 = vcmp.gt.s32.totalorder %v335, 6
    %v361 = vsel %vm360, 1, 0
    %362 = vset.pattern.permute.xlu0 0
    %363 = vperm.xlu0 %362, %v361
    %v364 = vpop.permute.xlu0 %363
    %vm365 = vcmp.eq.s32.totalorder %v364, 1
    %vm366 = vmand %vm337, %vm365
    %vm367 = vmor %vm359, %vm366
    %vm368 = vcmp.gt.s32.totalorder %v335, 2
    %v369 = vsel %vm368, 1, 0
    %370 = vset.pattern.permute.xlu0 0
    %371 = vperm.xlu0 %370, %v369
    %v372 = vpop.permute.xlu0 %371
    %vm373 = vcmp.eq.s32.totalorder %v372, 1
    %vm374 = vmand %vm336, %vm373
    %vm375 = vcmp.gt.s32.totalorder %v335, 5
    %v376 = vsel %vm375, 1, 0
    %377 = vset.pattern.permute.xlu0 0
    %378 = vperm.xlu0 %377, %v376
    %v379 = vpop.permute.xlu0 %378
    %vm380 = vcmp.eq.s32.totalorder %v379, 1
    %vm381 = vmand %vm337, %vm380
    %vm382 = vmor %vm374, %vm381
    %vm383 = vcmp.gt.s32.totalorder %v335, 3
    %v384 = vsel %vm383, 1, 0
    %385 = vset.pattern.permute.xlu0 0
    %386 = vperm.xlu0 %385, %v384
    %v387 = vpop.permute.xlu0 %386
    %vm388 = vcmp.eq.s32.totalorder %v387, 1
    %vm389 = vmand %vm336, %vm388
    %vm390 = vcmp.gt.s32.totalorder %v335, 4
    %v391 = vsel %vm390, 1, 0
    %392 = vset.pattern.permute.xlu0 0
    %393 = vperm.xlu0 %392, %v391
    %v394 = vpop.permute.xlu0 %393
    %vm395 = vcmp.eq.s32.totalorder %v394, 1
    %vm396 = vmand %vm337, %vm395
    %vm397 = vmor %vm389, %vm396
    %vm398 = vmand %vm336, %vm395
    %vm399 = vmand %vm337, %vm388
    %vm400 = vmor %vm398, %vm399
    %vm401 = vmand %vm336, %vm380
    %vm402 = vmand %vm337, %vm373
    %vm403 = vmor %vm401, %vm402
    %vm404 = vmand %vm336, %vm365
    %vm405 = vmand %vm337, %vm358
    %vm406 = vmor %vm404, %vm405
    %vm407 = vmand %vm336, %vm350
    %vm408 = vmand %vm337, %vm343
    %vm409 = vmor %vm407, %vm408
    %v410 = vadd.s32 %v53, 128
    %vm411 = vcmp.ge.s32.totalorder %v53, 128
    %vm412 = vcmp.ge.s32.totalorder %v410, 128
    %vm413 = vcmp.lt.s32.totalorder %v53, 192
    %vm414 = vcmp.lt.s32.totalorder %v410, 192
    %vm415 = vmand %vm411, %vm413
    %vm416 = vmand %vm412, %vm414
    %v417 = vld [vmem:[%s7] sm:$0xff]
    %v418 = vld [vmem:[%s7 + $0x8] sm:$0xff]
    %v419 = vld [vmem:[%s7 + $0x10] sm:$0xff]
    %v420 = vld [vmem:[%s7 + $0x18] sm:$0xff]
    %v421 = vld [vmem:[%s7 + $0x20] sm:$0xff]
    %v422 = vld [vmem:[%s7 + $0x28] sm:$0xff]
    %v423 = vld [vmem:[%s7 + $0x30] sm:$0xff]
    %v424 = vld [vmem:[%s7 + $0x38] sm:$0xff]
    %v425 = vld [vmem:[#allocation2] sm:$0xf]
    %v434 = vunpack.c.l.b16 %v417
    %v435 = vunpack.c.h.b16 %v417
    %v436 = vunpack.c.l.b16 %v418
    %v437 = vunpack.c.h.b16 %v418
    %v438 = vunpack.c.l.b16 %v419
    %v439 = vunpack.c.h.b16 %v419
    %v440 = vunpack.c.l.b16 %v420
    %v441 = vunpack.c.h.b16 %v420
    %v442 = vunpack.c.l.b16 %v421
    %v443 = vunpack.c.h.b16 %v421
    %v444 = vunpack.c.l.b16 %v422
    %v445 = vunpack.c.h.b16 %v422
    %v446 = vunpack.c.l.b16 %v423
    %v447 = vunpack.c.h.b16 %v423
    %v448 = vunpack.c.l.b16 %v424
    %v449 = vunpack.c.h.b16 %v424
    %v450 = vpack.c.b16 %v436, %v434
    %v451 = vpack.c.b16 %v437, %v435
    %v452 = vpack.c.b16 %v440, %v438
    %v453 = vpack.c.b16 %v441, %v439
    %v454 = vpack.c.b16 %v444, %v442
    %v455 = vpack.c.b16 %v445, %v443
    %v456 = vpack.c.b16 %v448, %v446
    %v457 = vpack.c.b16 %v449, %v447
    %vm466 = vcmask 523264
    %v468 = vsel %vm466, 0, 0
    %470 = vmatpush.bf16.msra.mxu0 0
    %471 = vmatpush.bf16.msra.mxu0 0
    %472 = vmatpush.bf16.msra.mxu0 0
    %473 = vmatpush.bf16.msra.mxu0 0
    %474 = vmatpush.bf16.msra.mxu0 %v456
    %475 = vmatpush.bf16.msra.mxu0 %v454
    %476 = vmatpush.bf16.msra.mxu0 %v452
    %477 = vmatpush.bf16.msra.mxu0 %v450
    %478 = vmatmul.bf16.gmra.mxu0 %v468
    %v479 = vpop.f32.mrf.mxu0
    %v480 = vadd.f32 0.0, %v479
    %v481 = vpop.f32.mrf.mxu0
    %482 = vdwg.mxu0
    %483 = vmatpush.bf16.msra.mxu0 0
    %484 = vmatpush.bf16.msra.mxu0 0
    %485 = vmatpush.bf16.msra.mxu0 0
    %486 = vmatpush.bf16.msra.mxu0 0
    %487 = vmatpush.bf16.msra.mxu0 %v457
    %488 = vmatpush.bf16.msra.mxu0 %v455
    %489 = vmatpush.bf16.msra.mxu0 %v453
    %490 = vmatpush.bf16.msra.mxu0 %v451
    %491 = vmatmul.bf16.gmra.mxu0 %v468
    %v492 = vpop.f32.mrf.mxu0
    %v493 = vadd.f32 0.0, %v492
    %v494 = vpop.f32.mrf.mxu0
    %495 = vdwg.mxu0
    %v498 = vrot.slane %v493, 6
    %v499 = vsel %vm282, %v480, %v498
    %v501 = vadd.f32 %v425, %v499
    %v502 = vxor.u32 %v501, 2147483648
    %v503 = vmul.f32 %v502, 1.442695
    %v504 = vpow.pop %v503
    %v505 = vadd.f32 %v504, 1.0
    %v506 = vrcp.pop %v505
    %v507 = vmul.f32 %v505, %v506
    %v508 = vsub.f32 1.0, %v507
    %v509 = vmul.f32 %v506, %v508
    %v510 = vadd.f32 %v506, %v509
    %vm511 = vweird.f32 %v505
    %vm512 = vweird.f32 %v506
    %vm513 = vmor %vm511, %vm512
    %v514 = vsel %vm513, %v506, %v510
    %v515 = vand.u32 2147483647, %v505
    %vm516 = vcmp.eq.f32.partialorder %v515, 8.507059e+37
    %v517 = vand.u32 %v505, 2147483648
    %v518 = vor.u32 1.1754944e-38, %v517
    %v519 = vsel %vm516, %v518, %v514
    %v520 = vmul.f32 1.0, %v519
    %v521 = vtanh.pop %v501
    %523 = vst [vmem:[#allocation1] ss:$4 sm:$0xff] %v521
    %v524 = vld.sshfl [vmem:[#allocation1] sm:$0xff pattern:$0x73625140]
    %v525 = vld.sshfl [vmem:[#allocation1 + $0x8] sm:$0xff pattern:$0x73625140]
    %529 = vst [vmem:[#allocation1] ss:$4 sm:$0xff] %v520
    %v530 = vld.sshfl [vmem:[#allocation1] sm:$0xff pattern:$0x73625140]
    %v531 = vld.sshfl [vmem:[#allocation1 + $0x8] sm:$0xff pattern:$0x73625140]
    %v534 = vsel %vm415, %v524, %v530
    %v535 = vsel %vm416, %v525, %v531
    %v536 = vmul.f32 %v534, 0.0
    %v537 = vmul.f32 %v534, %v535
    %539 = vrot.lane.b32.xlu0 %v537, 64
    %v540 = vpop.permute.xlu0 %539
    %v542 = vadd.f32 %v536, %v540
    %v543 = vtanh.pop %v542
    %v544 = vmul.f32 %v535, %v543
    %546 = vrot.lane.b32.xlu0 %v544, 64
    %v547 = vpop.permute.xlu0 %546
    %v549 = vsel %vm352, %v547, 0.0
    %551 = vrot.lane.b32.xlu0 %v542, 64
    %v552 = vpop.permute.xlu0 %551
    %v554 = vsel %vm352, %v552, 0.0
    %v555 = vld [vmem:[%s291] sm:$0xf]
    %v556 = vpack.c.bf16 %v549, %v549
    %v558 = vsel %vm466, %v556, 0
    %560 = vmatpush.bf16.msra.mxu0 0
    %561 = vmatpush.bf16.msra.mxu0 0
    %562 = vmatpush.bf16.msra.mxu0 0
    %563 = vmatpush.bf16.msra.mxu0 0
    %564 = vmatpush.bf16.msra.mxu0 %v456
    %565 = vmatpush.bf16.msra.mxu0 %v454
    %566 = vmatpush.bf16.msra.mxu0 %v452
    %567 = vmatpush.bf16.msra.mxu0 %v450
    %568 = vmatmul.bf16.gmra.mxu0 %v558
    %v569 = vpop.f32.mrf.mxu0
    %v570 = vadd.f32 0.0, %v569
    %v571 = vpop.f32.mrf.mxu0
    %572 = vdwg.mxu0
    %573 = vmatpush.bf16.msra.mxu0 0
    %574 = vmatpush.bf16.msra.mxu0 0
    %575 = vmatpush.bf16.msra.mxu0 0
    %576 = vmatpush.bf16.msra.mxu0 0
    %577 = vmatpush.bf16.msra.mxu0 %v457
    %578 = vmatpush.bf16.msra.mxu0 %v455
    %579 = vmatpush.bf16.msra.mxu0 %v453
    %580 = vmatpush.bf16.msra.mxu0 %v451
    %581 = vmatmul.bf16.gmra.mxu0 %v558
    %v582 = vpop.f32.mrf.mxu0
    %v583 = vadd.f32 0.0, %v582
    %v584 = vpop.f32.mrf.mxu0
    %585 = vdwg.mxu0
    %v588 = vrot.slane %v583, 6
    %v589 = vsel %vm282, %v570, %v588
    %v591 = vadd.f32 %v555, %v589
    %v592 = vxor.u32 %v591, 2147483648
    %v593 = vmul.f32 %v592, 1.442695
    %v594 = vpow.pop %v593
    %v595 = vadd.f32 %v594, 1.0
    %v596 = vrcp.pop %v595
    %v597 = vmul.f32 %v595, %v596
    %v598 = vsub.f32 1.0, %v597
    %v599 = vmul.f32 %v596, %v598
    %v600 = vadd.f32 %v596, %v599
    %vm601 = vweird.f32 %v595
    %vm602 = vweird.f32 %v596
    %vm603 = vmor %vm601, %vm602
    %v604 = vsel %vm603, %v596, %v600
    %v605 = vand.u32 2147483647, %v595
    %vm606 = vcmp.eq.f32.partialorder %v605, 8.507059e+37
    %v607 = vand.u32 %v595, 2147483648
    %v608 = vor.u32 1.1754944e-38, %v607
    %v609 = vsel %vm606, %v608, %v604
    %v610 = vmul.f32 1.0, %v609
    %v611 = vtanh.pop %v591
    %613 = vst [vmem:[#allocation1] ss:$4 sm:$0xff] %v611
    %v614 = vld.sshfl [vmem:[#allocation1] sm:$0xff pattern:$0x73625140]
    %v615 = vld.sshfl [vmem:[#allocation1 + $0x8] sm:$0xff pattern:$0x73625140]
    %619 = vst [vmem:[#allocation1] ss:$4 sm:$0xff] %v610
    %v620 = vld.sshfl [vmem:[#allocation1] sm:$0xff pattern:$0x73625140]
    %v621 = vld.sshfl [vmem:[#allocation1 + $0x8] sm:$0xff pattern:$0x73625140]
    %v624 = vsel %vm415, %v614, %v620
    %v625 = vsel %vm416, %v615, %v621
    %627 = vrot.lane.b32.xlu0 %v554, 64
    %v628 = vpop.permute.xlu0 %627
    %v630 = vmul.f32 %v624, %v628
    %v631 = vmul.f32 %v624, %v625
    %633 = vrot.lane.b32.xlu0 %v631, 64
    %v634 = vpop.permute.xlu0 %633
    %v636 = vadd.f32 %v630, %v634
    %v637 = vtanh.pop %v636
    %v638 = vmul.f32 %v625, %v637
    %640 = vrot.lane.b32.xlu0 %v638, 64
    %v641 = vpop.permute.xlu0 %640
    %v643 = vsel %vm367, %v641, %v549
    %645 = vrot.lane.b32.xlu0 %v636, 64
    %v646 = vpop.permute.xlu0 %645
    %v648 = vsel %vm367, %v646, %v554
    %v649 = vld [vmem:[%s298] sm:$0xf]
    %v650 = vpack.c.bf16 %v643, %v643
    %v652 = vsel %vm466, %v650, 0
    %654 = vmatpush.bf16.msra.mxu0 0
    %655 = vmatpush.bf16.msra.mxu0 0
    %656 = vmatpush.bf16.msra.mxu0 0
    %657 = vmatpush.bf16.msra.mxu0 0
    %658 = vmatpush.bf16.msra.mxu0 %v456
    %659 = vmatpush.bf16.msra.mxu0 %v454
    %660 = vmatpush.bf16.msra.mxu0 %v452
    %661 = vmatpush.bf16.msra.mxu0 %v450
    %662 = vmatmul.bf16.gmra.mxu0 %v652
    %v663 = vpop.f32.mrf.mxu0
    %v664 = vadd.f32 0.0, %v663
    %v665 = vpop.f32.mrf.mxu0
    %666 = vdwg.mxu0
    %667 = vmatpush.bf16.msra.mxu0 0
    %668 = vmatpush.bf16.msra.mxu0 0
    %669 = vmatpush.bf16.msra.mxu0 0
    %670 = vmatpush.bf16.msra.mxu0 0
    %671 = vmatpush.bf16.msra.mxu0 %v457
    %672 = vmatpush.bf16.msra.mxu0 %v455
    %673 = vmatpush.bf16.msra.mxu0 %v453
    %674 = vmatpush.bf16.msra.mxu0 %v451
    %675 = vmatmul.bf16.gmra.mxu0 %v652
    %v676 = vpop.f32.mrf.mxu0
    %v677 = vadd.f32 0.0, %v676
    %v678 = vpop.f32.mrf.mxu0
    %679 = vdwg.mxu0
    %v682 = vrot.slane %v677, 6
    %v683 = vsel %vm282, %v664, %v682
    %v685 = vadd.f32 %v649, %v683
    %v686 = vxor.u32 %v685, 2147483648
    %v687 = vmul.f32 %v686, 1.442695
    %v688 = vpow.pop %v687
    %v689 = vadd.f32 %v688, 1.0
    %v690 = vrcp.pop %v689
    %v691 = vmul.f32 %v689, %v690
    %v692 = vsub.f32 1.0, %v691
    %v693 = vmul.f32 %v690, %v692
    %v694 = vadd.f32 %v690, %v693
    %vm695 = vweird.f32 %v689
    %vm696 = vweird.f32 %v690
    %vm697 = vmor %vm695, %vm696
    %v698 = vsel %vm697, %v690, %v694
    %v699 = vand.u32 2147483647, %v689
    %vm700 = vcmp.eq.f32.partialorder %v699, 8.507059e+37
    %v701 = vand.u32 %v689, 2147483648
    %v702 = vor.u32 1.1754944e-38, %v701
    %v703 = vsel %vm700, %v702, %v698
    %v704 = vmul.f32 1.0, %v703
    %v705 = vtanh.pop %v685
    %707 = vst [vmem:[#allocation1] ss:$4 sm:$0xff] %v705
    %v708 = vld.sshfl [vmem:[#allocation1] sm:$0xff pattern:$0x73625140]
    %v709 = vld.sshfl [vmem:[#allocation1 + $0x8] sm:$0xff pattern:$0x73625140]
    %713 = vst [vmem:[#allocation1] ss:$4 sm:$0xff] %v704
    %v714 = vld.sshfl [vmem:[#allocation1] sm:$0xff pattern:$0x73625140]
    %v715 = vld.sshfl [vmem:[#allocation1 + $0x8] sm:$0xff pattern:$0x73625140]
    %v718 = vsel %vm415, %v708, %v714
    %v719 = vsel %vm416, %v709, %v715
    %721 = vrot.lane.b32.xlu0 %v648, 64
    %v722 = vpop.permute.xlu0 %721
    %v724 = vmul.f32 %v718, %v722
    %v725 = vmul.f32 %v718, %v719
    %727 = vrot.lane.b32.xlu0 %v725, 64
    %v728 = vpop.permute.xlu0 %727
    %v730 = vadd.f32 %v724, %v728
    %v731 = vtanh.pop %v730
    %v732 = vmul.f32 %v719, %v731
    %734 = vrot.lane.b32.xlu0 %v732, 64
    %v735 = vpop.permute.xlu0 %734
    %v737 = vsel %vm382, %v735, %v643
    %739 = vrot.lane.b32.xlu0 %v730, 64
    %v740 = vpop.permute.xlu0 %739
    %v742 = vsel %vm382, %v740, %v648
    %v743 = vld [vmem:[%s305] sm:$0xf]
    %v744 = vpack.c.bf16 %v737, %v737
    %v746 = vsel %vm466, %v744, 0
    %748 = vmatpush.bf16.msra.mxu0 0
    %749 = vmatpush.bf16.msra.mxu0 0
    %750 = vmatpush.bf16.msra.mxu0 0
    %751 = vmatpush.bf16.msra.mxu0 0
    %752 = vmatpush.bf16.msra.mxu0 %v456
    %753 = vmatpush.bf16.msra.mxu0 %v454
    %754 = vmatpush.bf16.msra.mxu0 %v452
    %755 = vmatpush.bf16.msra.mxu0 %v450
    %756 = vmatmul.bf16.gmra.mxu0 %v746
    %v757 = vpop.f32.mrf.mxu0
    %v758 = vadd.f32 0.0, %v757
    %v759 = vpop.f32.mrf.mxu0
    %760 = vdwg.mxu0
    %761 = vmatpush.bf16.msra.mxu0 0
    %762 = vmatpush.bf16.msra.mxu0 0
    %763 = vmatpush.bf16.msra.mxu0 0
    %764 = vmatpush.bf16.msra.mxu0 0
    %765 = vmatpush.bf16.msra.mxu0 %v457
    %766 = vmatpush.bf16.msra.mxu0 %v455
    %767 = vmatpush.bf16.msra.mxu0 %v453
    %768 = vmatpush.bf16.msra.mxu0 %v451
    %769 = vmatmul.bf16.gmra.mxu0 %v746
    %v770 = vpop.f32.mrf.mxu0
    %v771 = vadd.f32 0.0, %v770
    %v772 = vpop.f32.mrf.mxu0
    %773 = vdwg.mxu0
    %v776 = vrot.slane %v771, 6
    %v777 = vsel %vm282, %v758, %v776
    %v779 = vadd.f32 %v743, %v777
    %v780 = vxor.u32 %v779, 2147483648
    %v781 = vmul.f32 %v780, 1.442695
    %v782 = vpow.pop %v781
    %v783 = vadd.f32 %v782, 1.0
    %v784 = vrcp.pop %v783
    %v785 = vmul.f32 %v783, %v784
    %v786 = vsub.f32 1.0, %v785
    %v787 = vmul.f32 %v784, %v786
    %v788 = vadd.f32 %v784, %v787
    %vm789 = vweird.f32 %v783
    %vm790 = vweird.f32 %v784
    %vm791 = vmor %vm789, %vm790
    %v792 = vsel %vm791, %v784, %v788
    %v793 = vand.u32 2147483647, %v783
    %vm794 = vcmp.eq.f32.partialorder %v793, 8.507059e+37
    %v795 = vand.u32 %v783, 2147483648
    %v796 = vor.u32 1.1754944e-38, %v795
    %v797 = vsel %vm794, %v796, %v792
    %v798 = vmul.f32 1.0, %v797
    %v799 = vtanh.pop %v779
    %801 = vst [vmem:[#allocation1] ss:$4 sm:$0xff] %v799
    %v802 = vld.sshfl [vmem:[#allocation1] sm:$0xff pattern:$0x73625140]
    %v803 = vld.sshfl [vmem:[#allocation1 + $0x8] sm:$0xff pattern:$0x73625140]
    %807 = vst [vmem:[#allocation1] ss:$4 sm:$0xff] %v798
    %v808 = vld.sshfl [vmem:[#allocation1] sm:$0xff pattern:$0x73625140]
    %v809 = vld.sshfl [vmem:[#allocation1 + $0x8] sm:$0xff pattern:$0x73625140]
    %v812 = vsel %vm415, %v802, %v808
    %v813 = vsel %vm416, %v803, %v809
    %815 = vrot.lane.b32.xlu0 %v742, 64
    %v816 = vpop.permute.xlu0 %815
    %v818 = vmul.f32 %v812, %v816
    %v819 = vmul.f32 %v812, %v813
    %821 = vrot.lane.b32.xlu0 %v819, 64
    %v822 = vpop.permute.xlu0 %821
    %v824 = vadd.f32 %v818, %v822
    %v825 = vtanh.pop %v824
    %v826 = vmul.f32 %v813, %v825
    %828 = vrot.lane.b32.xlu0 %v826, 64
    %v829 = vpop.permute.xlu0 %828
    %v831 = vsel %vm397, %v829, %v737
    %833 = vrot.lane.b32.xlu0 %v824, 64
    %v834 = vpop.permute.xlu0 %833
    %v836 = vsel %vm397, %v834, %v742
    %v837 = vld [vmem:[%s312] sm:$0xf]
    %v838 = vpack.c.bf16 %v831, %v831
    %v840 = vsel %vm466, %v838, 0
    %842 = vmatpush.bf16.msra.mxu0 0
    %843 = vmatpush.bf16.msra.mxu0 0
    %844 = vmatpush.bf16.msra.mxu0 0
    %845 = vmatpush.bf16.msra.mxu0 0
    %846 = vmatpush.bf16.msra.mxu0 %v456
    %847 = vmatpush.bf16.msra.mxu0 %v454
    %848 = vmatpush.bf16.msra.mxu0 %v452
    %849 = vmatpush.bf16.msra.mxu0 %v450
    %850 = vmatmul.bf16.gmra.mxu0 %v840
    %v851 = vpop.f32.mrf.mxu0
    %v852 = vadd.f32 0.0, %v851
    %v853 = vpop.f32.mrf.mxu0
    %854 = vdwg.mxu0
    %855 = vmatpush.bf16.msra.mxu0 0
    %856 = vmatpush.bf16.msra.mxu0 0
    %857 = vmatpush.bf16.msra.mxu0 0
    %858 = vmatpush.bf16.msra.mxu0 0
    %859 = vmatpush.bf16.msra.mxu0 %v457
    %860 = vmatpush.bf16.msra.mxu0 %v455
    %861 = vmatpush.bf16.msra.mxu0 %v453
    %862 = vmatpush.bf16.msra.mxu0 %v451
    %863 = vmatmul.bf16.gmra.mxu0 %v840
    %v864 = vpop.f32.mrf.mxu0
    %v865 = vadd.f32 0.0, %v864
    %v866 = vpop.f32.mrf.mxu0
    %867 = vdwg.mxu0
    %v870 = vrot.slane %v865, 6
    %v871 = vsel %vm282, %v852, %v870
    %v873 = vadd.f32 %v837, %v871
    %v874 = vxor.u32 %v873, 2147483648
    %v875 = vmul.f32 %v874, 1.442695
    %v876 = vpow.pop %v875
    %v877 = vadd.f32 %v876, 1.0
    %v878 = vrcp.pop %v877
    %v879 = vmul.f32 %v877, %v878
    %v880 = vsub.f32 1.0, %v879
    %v881 = vmul.f32 %v878, %v880
    %v882 = vadd.f32 %v878, %v881
    %vm883 = vweird.f32 %v877
    %vm884 = vweird.f32 %v878
    %vm885 = vmor %vm883, %vm884
    %v886 = vsel %vm885, %v878, %v882
    %v887 = vand.u32 2147483647, %v877
    %vm888 = vcmp.eq.f32.partialorder %v887, 8.507059e+37
    %v889 = vand.u32 %v877, 2147483648
    %v890 = vor.u32 1.1754944e-38, %v889
    %v891 = vsel %vm888, %v890, %v886
    %v892 = vmul.f32 1.0, %v891
    %v893 = vtanh.pop %v873
    %895 = vst [vmem:[#allocation1] ss:$4 sm:$0xff] %v893
    %v896 = vld.sshfl [vmem:[#allocation1] sm:$0xff pattern:$0x73625140]
    %v897 = vld.sshfl [vmem:[#allocation1 + $0x8] sm:$0xff pattern:$0x73625140]
    %901 = vst [vmem:[#allocation1] ss:$4 sm:$0xff] %v892
    %v902 = vld.sshfl [vmem:[#allocation1] sm:$0xff pattern:$0x73625140]
    %v903 = vld.sshfl [vmem:[#allocation1 + $0x8] sm:$0xff pattern:$0x73625140]
    %v906 = vsel %vm415, %v896, %v902
    %v907 = vsel %vm416, %v897, %v903
    %909 = vrot.lane.b32.xlu0 %v836, 64
    %v910 = vpop.permute.xlu0 %909
    %v912 = vmul.f32 %v906, %v910
    %v913 = vmul.f32 %v906, %v907
    %915 = vrot.lane.b32.xlu0 %v913, 64
    %v916 = vpop.permute.xlu0 %915
    %v918 = vadd.f32 %v912, %v916
    %v919 = vtanh.pop %v918
    %v920 = vmul.f32 %v907, %v919
    %922 = vrot.lane.b32.xlu0 %v920, 64
    %v923 = vpop.permute.xlu0 %922
    %v925 = vsel %vm400, %v923, %v831
    %927 = vrot.lane.b32.xlu0 %v918, 64
    %v928 = vpop.permute.xlu0 %927
    %v930 = vsel %vm400, %v928, %v836
    %v931 = vld [vmem:[%s319] sm:$0xf]
    %v932 = vpack.c.bf16 %v925, %v925
    %v934 = vsel %vm466, %v932, 0
    %936 = vmatpush.bf16.msra.mxu0 0
    %937 = vmatpush.bf16.msra.mxu0 0
    %938 = vmatpush.bf16.msra.mxu0 0
    %939 = vmatpush.bf16.msra.mxu0 0
    %940 = vmatpush.bf16.msra.mxu0 %v456
    %941 = vmatpush.bf16.msra.mxu0 %v454
    %942 = vmatpush.bf16.msra.mxu0 %v452
    %943 = vmatpush.bf16.msra.mxu0 %v450
    %944 = vmatmul.bf16.gmra.mxu0 %v934
    %v945 = vpop.f32.mrf.mxu0
    %v946 = vadd.f32 0.0, %v945
    %v947 = vpop.f32.mrf.mxu0
    %948 = vdwg.mxu0
    %949 = vmatpush.bf16.msra.mxu0 0
    %950 = vmatpush.bf16.msra.mxu0 0
    %951 = vmatpush.bf16.msra.mxu0 0
    %952 = vmatpush.bf16.msra.mxu0 0
    %953 = vmatpush.bf16.msra.mxu0 %v457
    %954 = vmatpush.bf16.msra.mxu0 %v455
    %955 = vmatpush.bf16.msra.mxu0 %v453
    %956 = vmatpush.bf16.msra.mxu0 %v451
    %957 = vmatmul.bf16.gmra.mxu0 %v934
    %v958 = vpop.f32.mrf.mxu0
    %v959 = vadd.f32 0.0, %v958
    %v960 = vpop.f32.mrf.mxu0
    %961 = vdwg.mxu0
    %v964 = vrot.slane %v959, 6
    %v965 = vsel %vm282, %v946, %v964
    %v967 = vadd.f32 %v931, %v965
    %v968 = vxor.u32 %v967, 2147483648
    %v969 = vmul.f32 %v968, 1.442695
    %v970 = vpow.pop %v969
    %v971 = vadd.f32 %v970, 1.0
    %v972 = vrcp.pop %v971
    %v973 = vmul.f32 %v971, %v972
    %v974 = vsub.f32 1.0, %v973
    %v975 = vmul.f32 %v972, %v974
    %v976 = vadd.f32 %v972, %v975
    %vm977 = vweird.f32 %v971
    %vm978 = vweird.f32 %v972
    %vm979 = vmor %vm977, %vm978
    %v980 = vsel %vm979, %v972, %v976
    %v981 = vand.u32 2147483647, %v971
    %vm982 = vcmp.eq.f32.partialorder %v981, 8.507059e+37
    %v983 = vand.u32 %v971, 2147483648
    %v984 = vor.u32 1.1754944e-38, %v983
    %v985 = vsel %vm982, %v984, %v980
    %v986 = vmul.f32 1.0, %v985
    %v987 = vtanh.pop %v967
    %989 = vst [vmem:[#allocation1] ss:$4 sm:$0xff] %v987
    %v990 = vld.sshfl [vmem:[#allocation1] sm:$0xff pattern:$0x73625140]
    %v991 = vld.sshfl [vmem:[#allocation1 + $0x8] sm:$0xff pattern:$0x73625140]
    %995 = vst [vmem:[#allocation1] ss:$4 sm:$0xff] %v986
    %v996 = vld.sshfl [vmem:[#allocation1] sm:$0xff pattern:$0x73625140]
    %v997 = vld.sshfl [vmem:[#allocation1 + $0x8] sm:$0xff pattern:$0x73625140]
    %v1000 = vsel %vm415, %v990, %v996
    %v1001 = vsel %vm416, %v991, %v997
    %1003 = vrot.lane.b32.xlu0 %v930, 64
    %v1004 = vpop.permute.xlu0 %1003
    %v1006 = vmul.f32 %v1000, %v1004
    %v1007 = vmul.f32 %v1000, %v1001
    %1009 = vrot.lane.b32.xlu0 %v1007, 64
    %v1010 = vpop.permute.xlu0 %1009
    %v1012 = vadd.f32 %v1006, %v1010
    %v1013 = vtanh.pop %v1012
    %v1014 = vmul.f32 %v1001, %v1013
    %1016 = vrot.lane.b32.xlu0 %v1014, 64
    %v1017 = vpop.permute.xlu0 %1016
    %v1019 = vsel %vm403, %v1017, %v925
    %1021 = vrot.lane.b32.xlu0 %v1012, 64
    %v1022 = vpop.permute.xlu0 %1021
    %v1024 = vsel %vm403, %v1022, %v930
    %v1025 = vld [vmem:[%s326] sm:$0xf]
    %v1026 = vpack.c.bf16 %v1019, %v1019
    %v1028 = vsel %vm466, %v1026, 0
    %1030 = vmatpush.bf16.msra.mxu0 0
    %1031 = vmatpush.bf16.msra.mxu0 0
    %1032 = vmatpush.bf16.msra.mxu0 0
    %1033 = vmatpush.bf16.msra.mxu0 0
    %1034 = vmatpush.bf16.msra.mxu0 %v456
    %1035 = vmatpush.bf16.msra.mxu0 %v454
    %1036 = vmatpush.bf16.msra.mxu0 %v452
    %1037 = vmatpush.bf16.msra.mxu0 %v450
    %1038 = vmatmul.bf16.gmra.mxu0 %v1028
    %v1039 = vpop.f32.mrf.mxu0
    %v1040 = vadd.f32 0.0, %v1039
    %v1041 = vpop.f32.mrf.mxu0
    %1042 = vdwg.mxu0
    %1043 = vmatpush.bf16.msra.mxu0 0
    %1044 = vmatpush.bf16.msra.mxu0 0
    %1045 = vmatpush.bf16.msra.mxu0 0
    %1046 = vmatpush.bf16.msra.mxu0 0
    %1047 = vmatpush.bf16.msra.mxu0 %v457
    %1048 = vmatpush.bf16.msra.mxu0 %v455
    %1049 = vmatpush.bf16.msra.mxu0 %v453
    %1050 = vmatpush.bf16.msra.mxu0 %v451
    %1051 = vmatmul.bf16.gmra.mxu0 %v1028
    %v1052 = vpop.f32.mrf.mxu0
    %v1053 = vadd.f32 0.0, %v1052
    %v1054 = vpop.f32.mrf.mxu0
    %1055 = vdwg.mxu0
    %v1058 = vrot.slane %v1053, 6
    %v1059 = vsel %vm282, %v1040, %v1058
    %v1061 = vadd.f32 %v1025, %v1059
    %v1062 = vxor.u32 %v1061, 2147483648
    %v1063 = vmul.f32 %v1062, 1.442695
    %v1064 = vpow.pop %v1063
    %v1065 = vadd.f32 %v1064, 1.0
    %v1066 = vrcp.pop %v1065
    %v1067 = vmul.f32 %v1065, %v1066
    %v1068 = vsub.f32 1.0, %v1067
    %v1069 = vmul.f32 %v1066, %v1068
    %v1070 = vadd.f32 %v1066, %v1069
    %vm1071 = vweird.f32 %v1065
    %vm1072 = vweird.f32 %v1066
    %vm1073 = vmor %vm1071, %vm1072
    %v1074 = vsel %vm1073, %v1066, %v1070
    %v1075 = vand.u32 2147483647, %v1065
    %vm1076 = vcmp.eq.f32.partialorder %v1075, 8.507059e+37
    %v1077 = vand.u32 %v1065, 2147483648
    %v1078 = vor.u32 1.1754944e-38, %v1077
    %v1079 = vsel %vm1076, %v1078, %v1074
    %v1080 = vmul.f32 1.0, %v1079
    %v1081 = vtanh.pop %v1061
    %1083 = vst [vmem:[#allocation1] ss:$4 sm:$0xff] %v1081
    %v1084 = vld.sshfl [vmem:[#allocation1] sm:$0xff pattern:$0x73625140]
    %v1085 = vld.sshfl [vmem:[#allocation1 + $0x8] sm:$0xff pattern:$0x73625140]
    %1089 = vst [vmem:[#allocation1] ss:$4 sm:$0xff] %v1080
    %v1090 = vld.sshfl [vmem:[#allocation1] sm:$0xff pattern:$0x73625140]
    %v1091 = vld.sshfl [vmem:[#allocation1 + $0x8] sm:$0xff pattern:$0x73625140]
    %v1094 = vsel %vm415, %v1084, %v1090
    %v1095 = vsel %vm416, %v1085, %v1091
    %1097 = vrot.lane.b32.xlu0 %v1024, 64
    %v1098 = vpop.permute.xlu0 %1097
    %v1100 = vmul.f32 %v1094, %v1098
    %v1101 = vmul.f32 %v1094, %v1095
    %1103 = vrot.lane.b32.xlu0 %v1101, 64
    %v1104 = vpop.permute.xlu0 %1103
    %v1106 = vadd.f32 %v1100, %v1104
    %v1107 = vtanh.pop %v1106
    %v1108 = vmul.f32 %v1095, %v1107
    %1110 = vrot.lane.b32.xlu0 %v1108, 64
    %v1111 = vpop.permute.xlu0 %1110
    %v1113 = vsel %vm406, %v1111, %v1019
    %1115 = vrot.lane.b32.xlu0 %v1106, 64
    %v1116 = vpop.permute.xlu0 %1115
    %v1118 = vsel %vm406, %v1116, %v1024
    %v1119 = vld [vmem:[%s333] sm:$0xf]
    %v1120 = vpack.c.bf16 %v1113, %v1113
    %v1122 = vsel %vm466, %v1120, 0
    %1124 = vmatpush.bf16.msra.mxu0 0
    %1125 = vmatpush.bf16.msra.mxu0 0
    %1126 = vmatpush.bf16.msra.mxu0 0
    %1127 = vmatpush.bf16.msra.mxu0 0
    %1128 = vmatpush.bf16.msra.mxu0 %v456
    %1129 = vmatpush.bf16.msra.mxu0 %v454
    %1130 = vmatpush.bf16.msra.mxu0 %v452
    %1131 = vmatpush.bf16.msra.mxu0 %v450
    %1132 = vmatmul.bf16.gmra.mxu0 %v1122
    %v1133 = vpop.f32.mrf.mxu0
    %v1134 = vadd.f32 0.0, %v1133
    %v1135 = vpop.f32.mrf.mxu0
    %1136 = vdwg.mxu0
    %1137 = vmatpush.bf16.msra.mxu0 0
    %1138 = vmatpush.bf16.msra.mxu0 0
    %1139 = vmatpush.bf16.msra.mxu0 0
    %1140 = vmatpush.bf16.msra.mxu0 0
    %1141 = vmatpush.bf16.msra.mxu0 %v457
    %1142 = vmatpush.bf16.msra.mxu0 %v455
    %1143 = vmatpush.bf16.msra.mxu0 %v453
    %1144 = vmatpush.bf16.msra.mxu0 %v451
    %1145 = vmatmul.bf16.gmra.mxu0 %v1122
    %v1146 = vpop.f32.mrf.mxu0
    %v1147 = vadd.f32 0.0, %v1146
    %v1148 = vpop.f32.mrf.mxu0
    %1149 = vdwg.mxu0
    %v1152 = vrot.slane %v1147, 6
    %v1153 = vsel %vm282, %v1134, %v1152
    %v1155 = vadd.f32 %v1119, %v1153
    %v1156 = vxor.u32 %v1155, 2147483648
    %v1157 = vmul.f32 %v1156, 1.442695
    %v1158 = vpow.pop %v1157
    %v1159 = vadd.f32 %v1158, 1.0
    %v1160 = vrcp.pop %v1159
    %v1161 = vmul.f32 %v1159, %v1160
    %v1162 = vsub.f32 1.0, %v1161
    %v1163 = vmul.f32 %v1160, %v1162
    %v1164 = vadd.f32 %v1160, %v1163
    %vm1165 = vweird.f32 %v1159
    %vm1166 = vweird.f32 %v1160
    %vm1167 = vmor %vm1165, %vm1166
    %v1168 = vsel %vm1167, %v1160, %v1164
    %v1169 = vand.u32 2147483647, %v1159
    %vm1170 = vcmp.eq.f32.partialorder %v1169, 8.507059e+37
    %v1171 = vand.u32 %v1159, 2147483648
    %v1172 = vor.u32 1.1754944e-38, %v1171
    %v1173 = vsel %vm1170, %v1172, %v1168
    %v1174 = vmul.f32 1.0, %v1173
    %v1175 = vtanh.pop %v1155
    %1177 = vst [vmem:[#allocation1] ss:$4 sm:$0xff] %v1175
    %v1178 = vld.sshfl [vmem:[#allocation1] sm:$0xff pattern:$0x73625140]
    %v1179 = vld.sshfl [vmem:[#allocation1 + $0x8] sm:$0xff pattern:$0x73625140]
    %1183 = vst [vmem:[#allocation1] ss:$4 sm:$0xff] %v1174
    %v1184 = vld.sshfl [vmem:[#allocation1] sm:$0xff pattern:$0x73625140]
    %v1185 = vld.sshfl [vmem:[#allocation1 + $0x8] sm:$0xff pattern:$0x73625140]
    %v1188 = vsel %vm415, %v1178, %v1184
    %v1189 = vsel %vm416, %v1179, %v1185
    %1191 = vrot.lane.b32.xlu0 %v1118, 64
    %v1192 = vpop.permute.xlu0 %1191
    %v1194 = vmul.f32 %v1188, %v1192
    %v1195 = vmul.f32 %v1188, %v1189
    %1197 = vrot.lane.b32.xlu0 %v1195, 64
    %v1198 = vpop.permute.xlu0 %1197
    %v1200 = vadd.f32 %v1194, %v1198
    %v1201 = vtanh.pop %v1200
    %v1202 = vmul.f32 %v1189, %v1201
    %1204 = vrot.lane.b32.xlu0 %v1202, 64
    %v1205 = vpop.permute.xlu0 %1204
    %v1207 = vsel %vm409, %v1205, %v1113
    %v1208 = vpack.c.bf16 %v1207, %v1207
    %v1209 = vld [vmem:[%s8] sm:$0xf]
    %v1210 = vld [vmem:[%s8 + $0x4] sm:$0xf]
    %v1211 = vld [vmem:[%s8 + $0x8] sm:$0xf]
    %v1212 = vld [vmem:[%s8 + $0xc] sm:$0xf]
    %v1213 = vld [vmem:[%s8 + $0x10] sm:$0xf]
    %v1214 = vld [vmem:[%s8 + $0x14] sm:$0xf]
    %v1215 = vld [vmem:[%s8 + $0x18] sm:$0xf]
    %v1216 = vld [vmem:[%s8 + $0x1c] sm:$0xf]
    %v1217 = vld [vmem:[%s9] sm:$0x1]
    %v1219 = vperm.slane %v1217, 0
    %v1229 = vunpack.c.l.b16 %v1209
    %v1230 = vunpack.c.l.b16 %v1210
    %v1231 = vunpack.c.l.b16 %v1211
    %v1232 = vunpack.c.l.b16 %v1212
    %v1233 = vunpack.c.l.b16 %v1213
    %v1234 = vunpack.c.l.b16 %v1214
    %v1235 = vunpack.c.l.b16 %v1215
    %v1236 = vunpack.c.l.b16 %v1216
    %v1237 = vpack.c.b16 %v1230, %v1229
    %v1238 = vpack.c.b16 %v1232, %v1231
    %v1239 = vpack.c.b16 %v1234, %v1233
    %v1240 = vpack.c.b16 %v1236, %v1235
    %v1246 = vsel %vm466, %v1208, 0
    %1248 = vmatpush.bf16.msra.mxu0 0
    %1249 = vmatpush.bf16.msra.mxu0 0
    %1250 = vmatpush.bf16.msra.mxu0 0
    %1251 = vmatpush.bf16.msra.mxu0 0
    %1252 = vmatpush.bf16.msra.mxu0 %v1240
    %1253 = vmatpush.bf16.msra.mxu0 %v1239
    %1254 = vmatpush.bf16.msra.mxu0 %v1238
    %1255 = vmatpush.bf16.msra.mxu0 %v1237
    %1256 = vmatmul.bf16.gmra.mxu0 %v1246
    %v1257 = vpop.f32.mrf.mxu0
    %v1258 = vadd.f32 %v1219, %v1257
    %v1259 = vpop.f32.mrf.mxu0
    %1260 = vdwg.mxu0
    %v1261 = vlaneseq
    %v1262 = vshrl.u32 %v1261, 7
    %v1263 = vadd.s32 %v1262, 8
    %v1264 = vadd.s32 %v1262, 16
    %v1265 = vadd.s32 %v1262, 24
    %vm1266 = vcmp.ge.s32.totalorder %v1262, 8
    %vm1267 = vcmp.ge.s32.totalorder %v1263, 8
    %vm1268 = vcmp.ge.s32.totalorder %v1264, 8
    %vm1269 = vcmp.ge.s32.totalorder %v1265, 8
    %v1270 = vsel %vm1266, 1, 0
    %v1271 = vsel %vm1267, 1, 0
    %v1272 = vsel %vm1268, 1, 0
    %v1273 = vsel %vm1269, 1, 0
    %vm1274 = vcmp.ge.s32.totalorder %v53, 8
    %v1275 = vsel %vm1274, 1, 0
    %vm1276 = vcmp.ge.s32.totalorder %v1262, 12
    %vm1277 = vcmp.ge.s32.totalorder %v1263, 12
    %vm1278 = vcmp.ge.s32.totalorder %v1264, 12
    %vm1279 = vcmp.ge.s32.totalorder %v1265, 12
    %v1280 = vsel %vm1276, 1, 0
    %v1281 = vsel %vm1277, 1, 0
    %v1282 = vsel %vm1278, 1, 0
    %v1283 = vsel %vm1279, 1, 0
    %v1284 = vadd.s32 %v1270, %v1280
    %v1285 = vadd.s32 %v1271, %v1281
    %v1286 = vadd.s32 %v1272, %v1282
    %v1287 = vadd.s32 %v1273, %v1283
    %vm1288 = vcmp.ge.s32.totalorder %v53, 12
    %v1289 = vsel %vm1288, 1, 0
    %v1290 = vadd.s32 %v1275, %v1289
    %vm1291 = vcmp.ge.s32.totalorder %v1262, 18
    %vm1292 = vcmp.ge.s32.totalorder %v1263, 18
    %vm1293 = vcmp.ge.s32.totalorder %v1264, 18
    %vm1294 = vcmp.ge.s32.totalorder %v1265, 18
    %v1295 = vsel %vm1291, 1, 0
    %v1296 = vsel %vm1292, 1, 0
    %v1297 = vsel %vm1293, 1, 0
    %v1298 = vsel %vm1294, 1, 0
    %v1299 = vadd.s32 %v1284, %v1295
    %v1300 = vadd.s32 %v1285, %v1296
    %v1301 = vadd.s32 %v1286, %v1297
    %v1302 = vadd.s32 %v1287, %v1298
    %vm1303 = vcmp.ge.s32.totalorder %v53, 18
    %v1304 = vsel %vm1303, 1, 0
    %v1305 = vadd.s32 %v1290, %v1304
    %vm1306 = vcmp.eq.s32.totalorder %v1299, %v1305
    %vm1307 = vcmp.eq.s32.totalorder %v1300, %v1305
    %vm1308 = vcmp.eq.s32.totalorder %v1301, %v1305
    %vm1309 = vcmp.eq.s32.totalorder %v1302, %v1305
    %v1310 = vsel %vm1306, 1, 0
    %v1311 = vsel %vm1307, 1, 0
    %v1312 = vsel %vm1308, 1, 0
    %v1313 = vsel %vm1309, 1, 0
    %v1314 = vcvt.s32.f32 %v1310
    %v1315 = vcvt.s32.f32 %v1311
    %v1316 = vcvt.s32.f32 %v1312
    %v1317 = vcvt.s32.f32 %v1313
    %vm1318 = vcmask 238592
    %v1319 = vsel %vm1318, %v1258, -inf
    %1320 = vmax.xlane.f32.xlu0 %v1319
    %v1321 = vpop.xlane.xlu0 %1320
    %v1322 = vsub.f32 %v1258, %v1321
    %v1323 = vmul.f32 %v1322, 1.442695
    %v1324 = vpow.pop %v1323
    %v1326 = vsel %vm175, %v1324, 0
    %vm1328 = vcmask 1045504
    %v1330 = vsel %vm1328, %v1317, 0
    %1332 = vmatpush.msra.mxu0 0.0
    %1333 = vmatpush.msra.mxu0 0.0
    %1334 = vmatpush.msra.mxu0 0.0
    %1335 = vmatpush.msra.mxu0 0.0
    %1336 = vmatpush.msra.mxu0 0.0
    %1337 = vmatpush.msra.mxu0 0.0
    %1338 = vmatpush.msra.mxu0 0.0
    %1339 = vmatpush.msra.mxu0 0.0
    %1340 = vmatpush.msra.mxu0 0.0
    %1341 = vmatpush.msra.mxu0 0.0
    %1342 = vmatpush.msra.mxu0 0.0
    %1343 = vmatpush.msra.mxu0 0.0
    %1344 = vmatpush.msra.mxu0 %v1330
    %1345 = vmatpush.msra.mxu0 %v1316
    %1346 = vmatpush.msra.mxu0 %v1315
    %1347 = vmatpush.msra.mxu0 %v1314
    %1348 = vmatmul.f32.gmra.mxu0 %v1326
    %v1349 = vpop.f32.mrf.mxu0
    %v1350 = vadd.f32 0.0, %v1349
    %1351 = vdwg.mxu0
    %v1352 = vrcp.pop %v1350
    %v1353 = vmul.f32 %v1350, %v1352
    %v1354 = vsub.f32 1.0, %v1353
    %v1355 = vmul.f32 %v1352, %v1354
    %v1356 = vadd.f32 %v1352, %v1355
    %vm1357 = vweird.f32 %v1350
    %vm1358 = vweird.f32 %v1352
    %vm1359 = vmor %vm1357, %vm1358
    %v1360 = vsel %vm1359, %v1352, %v1356
    %v1361 = vand.u32 2147483647, %v1350
    %vm1362 = vcmp.eq.f32.partialorder %v1361, 8.507059e+37
    %v1363 = vand.u32 %v1350, 2147483648
    %v1364 = vor.u32 1.1754944e-38, %v1363
    %v1365 = vsel %vm1362, %v1364, %v1360
    %v1366 = vmul.f32 %v1324, %v1365
    %1367 = vst.msk [vmem:[%s10] sm:$0x3] %vm1318, %v1366
    // Predicated region
    $region46: #{classifier_forward.1} parent=1 // pred_check
      _
    $region47: #{classifier_forward.1} parent=1 // pred_check_branch
      %1369 = sbr.rel (0) target = $region49
    $region48: #{classifier_forward.1} parent=1 // pred_region
      _
    $region49: #{classifier_forward.1} parent=1 // pred_fallthru
      _
    // Predicated region
    $region50: #{classifier_forward.1} parent=1 // pred_check
      _
    $region51: #{classifier_forward.1} parent=1 // pred_check_branch
      %1371 = sbr.rel (0) target = $region53
    $region52: #{classifier_forward.1} parent=1 // pred_region
      _
    $region53: #{classifier_forward.1} parent=1 // pred_fallthru
      _
    %1372 = vsyncpa [#allocation4], 1

</llo_original>
